<compile_context>
chip_gen: v6e
topology: v6e:2x2x1
jax: 0.10.0
libtpu: 0.0.40
codegen_flags: <defaults>
</compile_context>

<pallas_src>
import jax
import jax.numpy as jnp
from jax.experimental import pallas as pl
from jax.experimental.pallas import tpu as pltpu


def _dwconv3x3_kernel(x_ref, w_ref, b_ref, o_ref, pad_ref):
    # x_ref, o_ref: (1, H, W, C)   w_ref: (9, C) f32   b_ref: (1, C) f32
    # pad_ref: VMEM scratch (H + 2, W, C) f32 -- image padded by one row top/bottom.
    _, H, W, C = x_ref.shape

    zero_row = jnp.zeros((1, W, C), dtype=jnp.float32)
    pad_ref[0:1, :, :] = zero_row
    pad_ref[H + 1:H + 2, :, :] = zero_row
    pad_ref[1:H + 1, :, :] = x_ref[0].astype(jnp.float32)

    w = w_ref[...]                                    # (9, C), stays resident
    zero_col = jnp.zeros((H, 1, C), dtype=jnp.float32)

    acc = jnp.zeros((H, W, C), dtype=jnp.float32)
    for kh in range(3):                               # unrolled at trace time
        # slab[h, w, c] = x[h + kh - 1, w, c]  (zero outside the image in H)
        slab = pad_ref[kh:kh + H, :, :]
        # column-shifted taps (zero-padded in W)
        left = jnp.concatenate([zero_col, slab[:, :W - 1, :]], axis=1)   # w - 1
        right = jnp.concatenate([slab[:, 1:, :], zero_col], axis=1)      # w + 1
        acc = acc + left * w[3 * kh + 0:3 * kh + 1, :]
        acc = acc + slab * w[3 * kh + 1:3 * kh + 2, :]
        acc = acc + right * w[3 * kh + 2:3 * kh + 3, :]

    acc = acc + b_ref[...]                            # (1, C) broadcasts over (H, W)
    o_ref[0] = acc.astype(o_ref.dtype)


def dwconv_forward(x, weight, bias, H, W, *, vmem_limit_bytes=48 * 1024 * 1024):
    """Depthwise 3x3 conv (stride 1, pad 1, bias, groups=C) on token-major input.

    x:      (B, N, C) with N == H * W   (as in SegFormer's DWConv.forward)
    weight: (C, 1, 3, 3)                (PyTorch depthwise Conv2d layout)
    bias:   (C,)
    Returns (B, N, C).
    """
    B, N, C = x.shape
    assert N == H * W, "N must equal H * W"
    assert weight.shape == (C, 1, 3, 3)

    x_img = x.reshape(B, H, W, C)                                    # free reshape
    w9 = jnp.transpose(weight.reshape(C, 9), (1, 0)).astype(jnp.float32)   # (9, C)
    b2 = bias.reshape(1, C).astype(jnp.float32)

    out = pl.pallas_call(
        _dwconv3x3_kernel,
        out_shape=jax.ShapeDtypeStruct((B, H, W, C), x.dtype),
        grid_spec=pltpu.PrefetchScalarGridSpec(
            num_scalar_prefetch=0,
            grid=(B,),
            in_specs=[
                pl.BlockSpec((1, H, W, C), lambda b: (b, 0, 0, 0)),  # one image / step
                pl.BlockSpec((9, C), lambda b: (0, 0)),              # resident weights
                pl.BlockSpec((1, C), lambda b: (0, 0)),              # resident bias
            ],
            out_specs=pl.BlockSpec((1, H, W, C), lambda b: (b, 0, 0, 0)),
            scratch_shapes=[pltpu.VMEM((H + 2, W, C), jnp.float32)],
        ),
        compiler_params=pltpu.CompilerParams(
            dimension_semantics=("parallel",),
            # Above the 32 MiB default for big SegFormer stages, with headroom
            # for v7x's 64 MiB physical VMEM.
            vmem_limit_bytes=vmem_limit_bytes,
        ),
    )(x_img, w9, b2)

    return out.reshape(B, N, C)


if __name__ == "__main__":
    # Small shapes consistent with the module: B=2, C=128 (lane-dense), H=W=16.
    B, C, H, W = 2, 128, 16, 16
    N = H * W

    key = jax.random.PRNGKey(0)
    k_x, k_w, k_b = jax.random.split(key, 3)

    x = jax.random.normal(k_x, (B, N, C), dtype=jnp.float32)

    # nn.Conv2d(C, C, 3, groups=C) default init: U(-1/sqrt(fan_in), +), fan_in = 1*3*3
    bound = 1.0 / (9.0 ** 0.5)
    weight = jax.random.uniform(k_w, (C, 1, 3, 3), minval=-bound, maxval=bound,
                                dtype=jnp.float32)
    bias = jax.random.uniform(k_b, (C,), minval=-bound, maxval=bound,
                              dtype=jnp.float32)

    y = dwconv_forward(x, weight, bias, H, W)
    y = jax.block_until_ready(y)

    # Pure-JAX reference of the PyTorch forward (depthwise cross-correlation + bias).
    x_img = x.reshape(B, H, W, C)
    xp = jnp.pad(x_img, ((0, 0), (1, 1), (1, 1), (0, 0)))
    ref = jnp.zeros_like(x_img)
    for kh in range(3):
        for kw in range(3):
            ref = ref + xp[:, kh:kh + H, kw:kw + W, :] * weight[:, 0, kh, kw]
    ref = (ref + bias).reshape(B, N, C)

    assert y.shape == (B, N, C), y.shape
    err = float(jnp.max(jnp.abs(y - ref)))
    assert jnp.allclose(y, ref, atol=1e-5, rtol=1e-5), f"mismatch vs reference: {err}"

    print("KERNEL_OK")
</pallas_src>

<mosaic_0001>
module attributes {stable_mosaic.version = 11 : i64} {
  func.func @_dwconv3x3_kernel(%arg0: i32, %arg1: memref<1x16x16x128xf32, #tpu.memory_space<vmem>>, %arg2: memref<9x128xf32, #tpu.memory_space<vmem>>, %arg3: memref<1x128xf32, #tpu.memory_space<vmem>>, %arg4: memref<1x16x16x128xf32, #tpu.memory_space<vmem>>, %arg5: memref<18x16x128xf32, #tpu.memory_space<vmem>>) attributes {dimension_semantics = [#tpu.dimension_semantics<parallel>], iteration_bounds = array<i64: 2>, scalar_prefetch = 0 : i64, scratch_operands = 1 : i64, tpu.core_type = #tpu.core_type<tc>, window_params = [{transform_indices = @transform_0, window_bounds = array<i64: 1, 16, 16, 128>}, {pipeline_mode = #tpu.pipeline_mode<synchronous>, transform_indices = @transform_1, window_bounds = array<i64: 9, 128>}, {pipeline_mode = #tpu.pipeline_mode<synchronous>, transform_indices = @transform_2, window_bounds = array<i64: 1, 128>}, {transform_indices = @transform_3, window_bounds = array<i64: 1, 16, 16, 128>}]} {
    %cst = arith.constant 0.000000e+00 : f32
    %0 = vector.broadcast %cst : f32 to vector<1x16x128xf32>
    %c0 = arith.constant 0 : index
    %c0_0 = arith.constant 0 : index
    %c0_1 = arith.constant 0 : index
    %1 = vector.load %arg5[%c0, %c0_0, %c0_1] : memref<18x16x128xf32, #tpu.memory_space<vmem>>, vector<1x16x128xf32>
    tpu.vector_store %arg5[%c0, %c0_0, %c0_1], %0 {strides = array<i32>} : memref<18x16x128xf32, #tpu.memory_space<vmem>>, vector<1x16x128xf32>,
    %c17 = arith.constant 17 : index
    %c0_2 = arith.constant 0 : index
    %c0_3 = arith.constant 0 : index
    %2 = vector.load %arg5[%c17, %c0_2, %c0_3] : memref<18x16x128xf32, #tpu.memory_space<vmem>>, vector<1x16x128xf32>
    tpu.vector_store %arg5[%c17, %c0_2, %c0_3], %0 {strides = array<i32>} : memref<18x16x128xf32, #tpu.memory_space<vmem>>, vector<1x16x128xf32>,
    %c0_4 = arith.constant 0 : index
    %c0_5 = arith.constant 0 : index
    %c0_6 = arith.constant 0 : index
    %c0_7 = arith.constant 0 : index
    %3 = vector.load %arg1[%c0_4, %c0_5, %c0_6, %c0_7] : memref<1x16x16x128xf32, #tpu.memory_space<vmem>>, vector<1x16x16x128xf32>
    %4 = vector.shape_cast %3 : vector<1x16x16x128xf32> to vector<16x16x128xf32>
    %c1 = arith.constant 1 : index
    %c0_8 = arith.constant 0 : index
    %c0_9 = arith.constant 0 : index
    %5 = vector.load %arg5[%c1, %c0_8, %c0_9] : memref<18x16x128xf32, #tpu.memory_space<vmem>>, vector<16x16x128xf32>
    tpu.vector_store %arg5[%c1, %c0_8, %c0_9], %4 {strides = array<i32>} : memref<18x16x128xf32, #tpu.memory_space<vmem>>, vector<16x16x128xf32>,
    %c0_10 = arith.constant 0 : index
    %c0_11 = arith.constant 0 : index
    %6 = vector.load %arg2[%c0_10, %c0_11] : memref<9x128xf32, #tpu.memory_space<vmem>>, vector<9x128xf32>
    %cst_12 = arith.constant 0.000000e+00 : f32
    %7 = vector.broadcast %cst_12 : f32 to vector<16x1x128xf32>
    %cst_13 = arith.constant 0.000000e+00 : f32
    %8 = vector.broadcast %cst_13 : f32 to vector<16x16x128xf32>
    %c0_14 = arith.constant 0 : index
    %c0_15 = arith.constant 0 : index
    %c0_16 = arith.constant 0 : index
    %9 = vector.load %arg5[%c0_14, %c0_15, %c0_16] : memref<18x16x128xf32, #tpu.memory_space<vmem>>, vector<16x16x128xf32>
    %10 = vector.extract_strided_slice %9 {offsets = [0, 0, 0], sizes = [16, 15, 128], strides = [1, 1, 1]} : vector<16x16x128xf32> to vector<16x15x128xf32>
    %11 = tpu.concatenate %7, %10 in 1 : vector<16x1x128xf32>, vector<16x15x128xf32> -> vector<16x16x128xf32>
    %12 = vector.extract_strided_slice %9 {offsets = [0, 1, 0], sizes = [16, 15, 128], strides = [1, 1, 1]} : vector<16x16x128xf32> to vector<16x15x128xf32>
    %13 = tpu.concatenate %12, %7 in 1 : vector<16x15x128xf32>, vector<16x1x128xf32> -> vector<16x16x128xf32>
    %14 = vector.extract_strided_slice %6 {offsets = [0, 0], sizes = [1, 128], strides = [1, 1]} : vector<9x128xf32> to vector<1x128xf32>
    %15 = vector.shape_cast %14 : vector<1x128xf32> to vector<1x1x128xf32>
    %16 = vector.broadcast %15 : vector<1x1x128xf32> to vector<16x16x128xf32>
    %17 = arith.mulf %11, %16 : vector<16x16x128xf32>
    %18 = arith.addf %8, %17 : vector<16x16x128xf32>
    %19 = vector.extract_strided_slice %6 {offsets = [1, 0], sizes = [1, 128], strides = [1, 1]} : vector<9x128xf32> to vector<1x128xf32>
    %20 = vector.shape_cast %19 : vector<1x128xf32> to vector<1x1x128xf32>
    %21 = vector.broadcast %20 : vector<1x1x128xf32> to vector<16x16x128xf32>
    %22 = arith.mulf %9, %21 : vector<16x16x128xf32>
    %23 = arith.addf %18, %22 : vector<16x16x128xf32>
    %24 = vector.extract_strided_slice %6 {offsets = [2, 0], sizes = [1, 128], strides = [1, 1]} : vector<9x128xf32> to vector<1x128xf32>
    %25 = vector.shape_cast %24 : vector<1x128xf32> to vector<1x1x128xf32>
    %26 = vector.broadcast %25 : vector<1x1x128xf32> to vector<16x16x128xf32>
    %27 = arith.mulf %13, %26 : vector<16x16x128xf32>
    %28 = arith.addf %23, %27 : vector<16x16x128xf32>
    %c1_17 = arith.constant 1 : index
    %c0_18 = arith.constant 0 : index
    %c0_19 = arith.constant 0 : index
    %29 = vector.load %arg5[%c1_17, %c0_18, %c0_19] : memref<18x16x128xf32, #tpu.memory_space<vmem>>, vector<16x16x128xf32>
    %30 = vector.extract_strided_slice %29 {offsets = [0, 0, 0], sizes = [16, 15, 128], strides = [1, 1, 1]} : vector<16x16x128xf32> to vector<16x15x128xf32>
    %31 = tpu.concatenate %7, %30 in 1 : vector<16x1x128xf32>, vector<16x15x128xf32> -> vector<16x16x128xf32>
    %32 = vector.extract_strided_slice %29 {offsets = [0, 1, 0], sizes = [16, 15, 128], strides = [1, 1, 1]} : vector<16x16x128xf32> to vector<16x15x128xf32>
    %33 = tpu.concatenate %32, %7 in 1 : vector<16x15x128xf32>, vector<16x1x128xf32> -> vector<16x16x128xf32>
    %34 = vector.extract_strided_slice %6 {offsets = [3, 0], sizes = [1, 128], strides = [1, 1]} : vector<9x128xf32> to vector<1x128xf32>
    %35 = vector.shape_cast %34 : vector<1x128xf32> to vector<1x1x128xf32>
    %36 = vector.broadcast %35 : vector<1x1x128xf32> to vector<16x16x128xf32>
    %37 = arith.mulf %31, %36 : vector<16x16x128xf32>
    %38 = arith.addf %28, %37 : vector<16x16x128xf32>
    %39 = vector.extract_strided_slice %6 {offsets = [4, 0], sizes = [1, 128], strides = [1, 1]} : vector<9x128xf32> to vector<1x128xf32>
    %40 = vector.shape_cast %39 : vector<1x128xf32> to vector<1x1x128xf32>
    %41 = vector.broadcast %40 : vector<1x1x128xf32> to vector<16x16x128xf32>
    %42 = arith.mulf %29, %41 : vector<16x16x128xf32>
    %43 = arith.addf %38, %42 : vector<16x16x128xf32>
    %44 = vector.extract_strided_slice %6 {offsets = [5, 0], sizes = [1, 128], strides = [1, 1]} : vector<9x128xf32> to vector<1x128xf32>
    %45 = vector.shape_cast %44 : vector<1x128xf32> to vector<1x1x128xf32>
    %46 = vector.broadcast %45 : vector<1x1x128xf32> to vector<16x16x128xf32>
    %47 = arith.mulf %33, %46 : vector<16x16x128xf32>
    %48 = arith.addf %43, %47 : vector<16x16x128xf32>
    %c2 = arith.constant 2 : index
    %c0_20 = arith.constant 0 : index
    %c0_21 = arith.constant 0 : index
    %49 = vector.load %arg5[%c2, %c0_20, %c0_21] : memref<18x16x128xf32, #tpu.memory_space<vmem>>, vector<16x16x128xf32>
    %50 = vector.extract_strided_slice %49 {offsets = [0, 0, 0], sizes = [16, 15, 128], strides = [1, 1, 1]} : vector<16x16x128xf32> to vector<16x15x128xf32>
    %51 = tpu.concatenate %7, %50 in 1 : vector<16x1x128xf32>, vector<16x15x128xf32> -> vector<16x16x128xf32>
    %52 = vector.extract_strided_slice %49 {offsets = [0, 1, 0], sizes = [16, 15, 128], strides = [1, 1, 1]} : vector<16x16x128xf32> to vector<16x15x128xf32>
    %53 = tpu.concatenate %52, %7 in 1 : vector<16x15x128xf32>, vector<16x1x128xf32> -> vector<16x16x128xf32>
    %54 = vector.extract_strided_slice %6 {offsets = [6, 0], sizes = [1, 128], strides = [1, 1]} : vector<9x128xf32> to vector<1x128xf32>
    %55 = vector.shape_cast %54 : vector<1x128xf32> to vector<1x1x128xf32>
    %56 = vector.broadcast %55 : vector<1x1x128xf32> to vector<16x16x128xf32>
    %57 = arith.mulf %51, %56 : vector<16x16x128xf32>
    %58 = arith.addf %48, %57 : vector<16x16x128xf32>
    %59 = vector.extract_strided_slice %6 {offsets = [7, 0], sizes = [1, 128], strides = [1, 1]} : vector<9x128xf32> to vector<1x128xf32>
    %60 = vector.shape_cast %59 : vector<1x128xf32> to vector<1x1x128xf32>
    %61 = vector.broadcast %60 : vector<1x1x128xf32> to vector<16x16x128xf32>
    %62 = arith.mulf %49, %61 : vector<16x16x128xf32>
    %63 = arith.addf %58, %62 : vector<16x16x128xf32>
    %64 = vector.extract_strided_slice %6 {offsets = [8, 0], sizes = [1, 128], strides = [1, 1]} : vector<9x128xf32> to vector<1x128xf32>
    %65 = vector.shape_cast %64 : vector<1x128xf32> to vector<1x1x128xf32>
    %66 = vector.broadcast %65 : vector<1x1x128xf32> to vector<16x16x128xf32>
    %67 = arith.mulf %53, %66 : vector<16x16x128xf32>
    %68 = arith.addf %63, %67 : vector<16x16x128xf32>
    %c0_22 = arith.constant 0 : index
    %c0_23 = arith.constant 0 : index
    %69 = vector.load %arg3[%c0_22, %c0_23] : memref<1x128xf32, #tpu.memory_space<vmem>>, vector<1x128xf32>
    %70 = vector.shape_cast %69 : vector<1x128xf32> to vector<1x1x128xf32>
    %71 = vector.broadcast %70 : vector<1x1x128xf32> to vector<16x16x128xf32>
    %72 = arith.addf %68, %71 : vector<16x16x128xf32>
    %c0_24 = arith.constant 0 : index
    %c0_25 = arith.constant 0 : index
    %c0_26 = arith.constant 0 : index
    %c0_27 = arith.constant 0 : index
    %73 = vector.load %arg4[%c0_24, %c0_25, %c0_26, %c0_27] : memref<1x16x16x128xf32, #tpu.memory_space<vmem>>, vector<1x16x16x128xf32>
    %74 = vector.shape_cast %73 : vector<1x16x16x128xf32> to vector<16x16x128xf32>
    %75 = vector.shape_cast %72 : vector<16x16x128xf32> to vector<1x16x16x128xf32>
    tpu.vector_store %arg4[%c0_24, %c0_25, %c0_26, %c0_27], %75 {strides = array<i32>} : memref<1x16x16x128xf32, #tpu.memory_space<vmem>>, vector<1x16x16x128xf32>,
    return
  }
  func.func @transform_0(%arg0: i32) -> (i32, i32, i32, i32) {
    %c0_i32 = arith.constant 0 : i32
    %c0_i32_0 = arith.constant 0 : i32
    %c0_i32_1 = arith.constant 0 : i32
    %c0_i32_2 = arith.constant 0 : i32
    return %arg0, %c0_i32, %c0_i32_0, %c0_i32_1 : i32, i32, i32, i32
  }
  func.func @transform_1(%arg0: i32) -> (i32, i32) {
    %c0_i32 = arith.constant 0 : i32
    %c0_i32_0 = arith.constant 0 : i32
    %c0_i32_1 = arith.constant 0 : i32
    return %c0_i32, %c0_i32_0 : i32, i32
  }
  func.func @transform_2(%arg0: i32) -> (i32, i32) {
    %c0_i32 = arith.constant 0 : i32
    %c0_i32_0 = arith.constant 0 : i32
    %c0_i32_1 = arith.constant 0 : i32
    return %c0_i32, %c0_i32_0 : i32, i32
  }
  func.func @transform_3(%arg0: i32) -> (i32, i32, i32, i32) {
    %c0_i32 = arith.constant 0 : i32
    %c0_i32_0 = arith.constant 0 : i32
    %c0_i32_1 = arith.constant 0 : i32
    %c0_i32_2 = arith.constant 0 : i32
    return %arg0, %c0_i32, %c0_i32_0, %c0_i32_1 : i32, i32, i32, i32
  }
}

</mosaic_0001>

<llo_original>
// kernel: tpu_custom_call.1
$region0: #{tpu_custom_call.1}
  #allocation0 [shape = 'u32[]', space=smem, size = 0x4, offset = 0x4, fixed_abs, tag = 'smem constant byte address 0x4 - core index']
  #allocation1 [shape = 'u32[144,128]{1,0:T(1,128)}', space=vmem, size = 0x12000, scoped, tag = 'internal scratch']
  #allocation2 [shape = 'f32[18,16,128]{2,1,0:T(8,128)}', space=vmem, size = 0x24000, scoped, tag = 'scratch operand']
  %s0 = inlined_call_operand.hbm [shape: f32[2,16,16,128], index: 0, kind: input, shape index: {}]
  %s1 = inlined_call_operand.hbm [shape: f32[9,128], index: 1, kind: input, shape index: {}]
  %s2 = inlined_call_operand.vmem [shape: f32[1,128], index: 2, kind: input, shape index: {}]
  %s3 = inlined_call_operand.hbm [shape: f32[2,16,16,128], index: 3, kind: output, shape index: {}]
  %s4 = sld [smem:[#allocation0]]
  $region53: #{tpu_custom_call.1} parent=0
    _
  %s6 = ssub.s32 1, %s4
  %s7 = scalar_select 0, %s6, %s4
  $region1: #{tpu_custom_call.1} parent=0
    #allocation3 [shape = 'u8[262144]{0}', space=vmem, size = 0x40000, scoped, tag = 'input window, operand 0']
    #allocation4 [shape = 's32[2]{0}', space=sflag, size = 0x8, scoped, tag = 'scoped memory for tpu_custom_call.1']
    #allocation5 [shape = 's32[2]{0}', space=sflag, size = 0x8, scoped, tag = 'scoped memory for tpu_custom_call.1']
    #allocation6 [shape = 'u8[8192]{0}', space=vmem, size = 0x2000, scoped, tag = 'input window, operand 1, single buffered']
    #allocation7 [shape = 's32[1]{0}', space=sflag, size = 0x4, scoped, tag = 'scoped memory for tpu_custom_call.1']
    #allocation8 [shape = 'u8[262144]{0}', space=vmem, size = 0x40000, scoped, tag = 'output window, operand 0']
    %8 = vsyncpa [#allocation4], 0
    %s9 = scalar_lea.sflag [#allocation4], 1
    %10 = vsyncpa %s9, 0
    %11 = vsyncpa [#allocation7], 0
    %12 = vsyncpa [#allocation5], 0
    %s13 = scalar_lea.sflag [#allocation5], 1
    %14 = vsyncpa %s13, 0
    loop: start=0, step=1, limit=4
    $region2: #{tpu_custom_call.1} parent=1 // loop_pre_header
      _
    $region3: #{tpu_custom_call.1} parent=1 // loop_header
      %s16 = sphi 0, %s20
      %p17 = scmp.ge.s32.totalorder %s16, 4
      %s26 = sphi 0, %s28
      %s29 = sphi 0, %s26
      %s30 = sphi 0, %s29
      %s46 = sphi 0, %s30
      %s50 = sphi 0, %s50
      %s52 = sphi 0, %s50
      %s53 = sphi 0, %s52
      %s67 = sphi 0, %s53
      %s71 = sphi 0, %s71
      %s73 = sphi 0, %s71
      %s74 = sphi 0, %s73
      %s88 = sphi 0, %s74
      %s94 = sphi 0, %s96
      %s97 = sphi 0, %s94
      %s98 = sphi 0, %s97
      %s114 = sphi 0, %s98
    $region4: #{tpu_custom_call.1} parent=1 // loop_header_branch
      %19 = sbr.rel (%p17) target = $region8
    $region5: #{tpu_custom_call.1} parent=1 // loop_body
      %s21 = ssub.s32 %s16, 1
      %s22 = ssub.s32 %s16, 2
      %s23 = sadd.s32 %s16, 1
      %s24 = ssub.s32 %s16, %s23
      %p25 = scmp.eq.s32.totalorder %s24, 0
      %s27 = sadd.s32 %s26, 1
      %s28 = scalar_select %p25, %s26, %s27
      %p31 = pneg %p25
      %p32 = scmp.eq.s32.totalorder %s16, 1
      %p33 = por %p31, %p32
      %p34 = scmp.ne.s32.totalorder %s26, %s29
      %p35 = scmp.eq.s32.totalorder %s16, 0
      %p36 = por %p34, %p35
      %p37 = scmp.ne.s32.totalorder %s26, %s29
      %p38 = scmp.eq.s32.totalorder %s21, 1
      %p39 = por %p37, %p38
      %p40 = scmp.ne.s32.totalorder %s29, %s30
      %p41 = scmp.eq.s32.totalorder %s21, 0
      %p42 = por %p40, %p41
      %p43 = scmp.ne.s32.totalorder %s29, %s30
      %p44 = scmp.eq.s32.totalorder %s22, 1
      %p45 = por %p43, %p44
      %p47 = scmp.ne.s32.totalorder %s30, %s46
      %p48 = scmp.eq.s32.totalorder %s22, 0
      %p49 = por %p47, %p48
      %s51 = sadd.s32 %s50, 1
      %p54 = scmp.eq.s32.totalorder %s16, 1
      %p55 = scmp.ne.s32.totalorder %s50, %s52
      %p56 = scmp.eq.s32.totalorder %s16, 0
      %p57 = por %p55, %p56
      %p58 = scmp.ne.s32.totalorder %s50, %s52
      %p59 = scmp.eq.s32.totalorder %s21, 1
      %p60 = por %p58, %p59
      %p61 = scmp.ne.s32.totalorder %s52, %s53
      %p62 = scmp.eq.s32.totalorder %s21, 0
      %p63 = por %p61, %p62
      %p64 = scmp.ne.s32.totalorder %s52, %s53
      %p65 = scmp.eq.s32.totalorder %s22, 1
      %p66 = por %p64, %p65
      %p68 = scmp.ne.s32.totalorder %s53, %s67
      %p69 = scmp.eq.s32.totalorder %s22, 0
      %p70 = por %p68, %p69
      %s72 = sadd.s32 %s71, 1
      %p75 = scmp.eq.s32.totalorder %s16, 1
      %p76 = scmp.ne.s32.totalorder %s71, %s73
      %p77 = scmp.eq.s32.totalorder %s16, 0
      %p78 = por %p76, %p77
      %p79 = scmp.ne.s32.totalorder %s71, %s73
      %p80 = scmp.eq.s32.totalorder %s21, 1
      %p81 = por %p79, %p80
      %p82 = scmp.ne.s32.totalorder %s73, %s74
      %p83 = scmp.eq.s32.totalorder %s21, 0
      %p84 = por %p82, %p83
      %p85 = scmp.ne.s32.totalorder %s73, %s74
      %p86 = scmp.eq.s32.totalorder %s22, 1
      %p87 = por %p85, %p86
      %p89 = scmp.ne.s32.totalorder %s74, %s88
      %p90 = scmp.eq.s32.totalorder %s22, 0
      %p91 = por %p89, %p90
      %s92 = ssub.s32 %s16, %s23
      %p93 = scmp.eq.s32.totalorder %s92, 0
      %s95 = sadd.s32 %s94, 1
      %s96 = scalar_select %p93, %s94, %s95
      %p99 = pneg %p93
      %p100 = scmp.eq.s32.totalorder %s16, 1
      %p101 = por %p99, %p100
      %p102 = scmp.ne.s32.totalorder %s94, %s97
      %p103 = scmp.eq.s32.totalorder %s16, 0
      %p104 = por %p102, %p103
      %p105 = scmp.ne.s32.totalorder %s94, %s97
      %p106 = scmp.eq.s32.totalorder %s21, 1
      %p107 = por %p105, %p106
      %p108 = scmp.ne.s32.totalorder %s97, %s98
      %p109 = scmp.eq.s32.totalorder %s21, 0
      %p110 = por %p108, %p109
      %p111 = scmp.ne.s32.totalorder %s97, %s98
      %p112 = scmp.eq.s32.totalorder %s22, 1
      %p113 = por %p111, %p112
      %p115 = scmp.ne.s32.totalorder %s98, %s114
      %p116 = scmp.eq.s32.totalorder %s22, 0
      %p117 = por %p115, %p116
      %p118 = scmp.le.s32.totalorder 1, %s16
      %p119 = scmp.lt.s32.totalorder %s16, 3
      %p120 = pnand %p118, %p119
      %p121 = pneg %p120
      // Predicated region
      $region9: #{tpu_custom_call.1} parent=5 // pred_check
        _
      $region10: #{tpu_custom_call.1} parent=5 // pred_check_branch
        %123 = sbr.rel (%p120) target = $region12
      $region11: #{tpu_custom_call.1} parent=5 // pred_region
        %s124 = ssub.s32 %s16, 1
        // Predicated region
        $region13: #{tpu_custom_call.1} parent=11 // pred_check
          %p125 = pneg %p63
        $region14: #{tpu_custom_call.1} parent=11 // pred_check_branch
          %127 = sbr.rel (%p125) target = $region16
        $region15: #{tpu_custom_call.1} parent=11 // pred_region
          %s129 = ssub.s32 256, 256
          %130 = vsyncadd [#allocation7], %s129
          %s131 = sshll.u32 [#allocation6], 4
          %s132 = int_to_ptr.vmem [resolvable:$true] %s131
          %137 = dma.hbm_to_vmem [thread:$0]  %s1, 256, %s132, [#allocation7], 128, 128, 8
        $region16: #{tpu_custom_call.1} parent=11 // pred_fallthru
          _
        // Predicated region
        $region17: #{tpu_custom_call.1} parent=11 // pred_check
          %p138 = pneg %p84
        $region18: #{tpu_custom_call.1} parent=11 // pred_check_branch
          %140 = sbr.rel (%p138) target = $region20
        $region19: #{tpu_custom_call.1} parent=11 // pred_region
          _
        $region20: #{tpu_custom_call.1} parent=11 // pred_fallthru
          _
      $region12: #{tpu_custom_call.1} parent=5 // pred_fallthru
        _
      %p141 = scmp.lt.s32.totalorder %s16, 2
      // Predicated region
      $region21: #{tpu_custom_call.1} parent=5 // pred_check
        %p142 = pneg %p141
      $region22: #{tpu_custom_call.1} parent=5 // pred_check_branch
        %144 = sbr.rel (%p142) target = $region24
      $region23: #{tpu_custom_call.1} parent=5 // pred_region
        // Predicated region
        $region25: #{tpu_custom_call.1} parent=23 // pred_check
          %p145 = pneg %p36
        $region26: #{tpu_custom_call.1} parent=23 // pred_check_branch
          %147 = sbr.rel (%p145) target = $region28
        $region27: #{tpu_custom_call.1} parent=23 // pred_region
          %s148 = sand.u32 %s26, 1
          %s149 = scalar_lea.sflag [#allocation4], %s148
          %s150 = sand.u32 %s26, 1
          %s151 = smul.addr %s150, 256
          %s152 = scalar_lea.vmem [#allocation3], %s151
          %s154 = ssub.s32 4096, 4096
          %155 = vsyncadd %s149, %s154
          %s156 = smul.addr %s16, 32
          %s157 = smul.addr %s156, 128
          %s158 = scalar_lea.hbm %s0, %s157
          %s159 = sshll.u32 %s152, 4
          %s160 = int_to_ptr.vmem [resolvable:$true] %s159
          %165 = dma.hbm_to_vmem [thread:$0]  %s158, 4096, %s160, %s149, 128, 128, 8
        $region28: #{tpu_custom_call.1} parent=23 // pred_fallthru
          _
      $region24: #{tpu_custom_call.1} parent=5 // pred_fallthru
        _
      %p166 = scmp.le.s32.totalorder 1, %s16
      %p167 = scmp.lt.s32.totalorder %s16, 3
      %p168 = pnand %p166, %p167
      %p169 = pneg %p168
      // Predicated region
      $region29: #{tpu_custom_call.1} parent=5 // pred_check
        _
      $region30: #{tpu_custom_call.1} parent=5 // pred_check_branch
        %171 = sbr.rel (%p168) target = $region32
      $region31: #{tpu_custom_call.1} parent=5 // pred_region
        %s172 = ssub.s32 %s16, 1
        %s173 = sand.u32 %s29, 1
        %s174 = scalar_lea.sflag [#allocation4], %s173
        %s175 = sand.u32 %s29, 1
        %s176 = smul.addr %s175, 256
        %s177 = scalar_lea.vmem [#allocation3], %s176
        // Predicated region
        $region33: #{tpu_custom_call.1} parent=31 // pred_check
          %p178 = pneg %p42
        $region34: #{tpu_custom_call.1} parent=31 // pred_check_branch
          %180 = sbr.rel (%p178) target = $region36
        $region35: #{tpu_custom_call.1} parent=31 // pred_region
          %181 = dma.done %s174, 4096
        $region36: #{tpu_custom_call.1} parent=31 // pred_fallthru
          _
        // Predicated region
        $region37: #{tpu_custom_call.1} parent=31 // pred_check
          %p182 = pneg %p63
        $region38: #{tpu_custom_call.1} parent=31 // pred_check_branch
          %184 = sbr.rel (%p182) target = $region40
        $region39: #{tpu_custom_call.1} parent=31 // pred_region
          %185 = dma.done [#allocation7], 256
        $region40: #{tpu_custom_call.1} parent=31 // pred_fallthru
          _
        %s186 = sand.u32 %s29, 1
        %s187 = scalar_lea.sflag [#allocation4], %s186
        %s188 = sand.u32 %s29, 1
        %s189 = smul.addr %s188, 256
        %s190 = scalar_lea.vmem [#allocation3], %s189
        %p191 = pneg %p42
        %p192 = pneg %p39
        %p193 = pneg %p63
        %p194 = pneg %p60
        %p195 = pneg %p84
        %p196 = pneg %p81
        %p197 = pneg %p110
        %p198 = pneg %p107
        %s199 = sand.u32 %s97, 1
        %s200 = scalar_lea.sflag [#allocation5], %s199
        %s201 = sand.u32 %s97, 1
        %s202 = smul.addr %s201, 256
        %s203 = scalar_lea.vmem [#allocation8], %s202
        %204 = vst [vmem:[#allocation2] sm:$0xff] 0.0
        %205 = vst [vmem:[#allocation2 + $0x8] sm:$0xff] 0.0
        %s206 = scalar_lea.vmem [#allocation2], 272
        %207 = vst [vmem:[%s206] sm:$0xff] 0.0
        %208 = vst [vmem:[%s206 + $0x8] sm:$0xff] 0.0
        %v209 = vld [vmem:[%s177] sm:$0xff]
        %v210 = vld [vmem:[%s177 + $0x8] sm:$0xff]
        %v211 = vld [vmem:[%s177 + $0x10] sm:$0xff]
        %v212 = vld [vmem:[%s177 + $0x18] sm:$0xff]
        %v213 = vld [vmem:[%s177 + $0x20] sm:$0xff]
        %v214 = vld [vmem:[%s177 + $0x28] sm:$0xff]
        %v215 = vld [vmem:[%s177 + $0x30] sm:$0xff]
        %v216 = vld [vmem:[%s177 + $0x38] sm:$0xff]
        %v217 = vld [vmem:[%s177 + $0x40] sm:$0xff]
        %v218 = vld [vmem:[%s177 + $0x48] sm:$0xff]
        %v219 = vld [vmem:[%s177 + $0x50] sm:$0xff]
        %v220 = vld [vmem:[%s177 + $0x58] sm:$0xff]
        %v221 = vld [vmem:[%s177 + $0x60] sm:$0xff]
        %v222 = vld [vmem:[%s177 + $0x68] sm:$0xff]
        %v223 = vld [vmem:[%s177 + $0x70] sm:$0xff]
        %v224 = vld [vmem:[%s177 + $0x78] sm:$0xff]
        %v225 = vld [vmem:[%s177 + $0x80] sm:$0xff]
        %v226 = vld [vmem:[%s177 + $0x88] sm:$0xff]
        %v227 = vld [vmem:[%s177 + $0x90] sm:$0xff]
        %v228 = vld [vmem:[%s177 + $0x98] sm:$0xff]
        %v229 = vld [vmem:[%s177 + $0xa0] sm:$0xff]
        %v230 = vld [vmem:[%s177 + $0xa8] sm:$0xff]
        %v231 = vld [vmem:[%s177 + $0xb0] sm:$0xff]
        %v232 = vld [vmem:[%s177 + $0xb8] sm:$0xff]
        %v233 = vld [vmem:[%s177 + $0xc0] sm:$0xff]
        %v234 = vld [vmem:[%s177 + $0xc8] sm:$0xff]
        %v235 = vld [vmem:[%s177 + $0xd0] sm:$0xff]
        %v236 = vld [vmem:[%s177 + $0xd8] sm:$0xff]
        %v237 = vld [vmem:[%s177 + $0xe0] sm:$0xff]
        %v238 = vld [vmem:[%s177 + $0xe8] sm:$0xff]
        %v239 = vld [vmem:[%s177 + $0xf0] sm:$0xff]
        %v240 = vld [vmem:[%s177 + $0xf8] sm:$0xff]
        %s241 = scalar_lea.vmem [#allocation2], 16
        %242 = vst [vmem:[%s241] sm:$0xff] %v209
        %243 = vst [vmem:[%s241 + $0x8] sm:$0xff] %v210
        %244 = vst [vmem:[%s241 + $0x10] sm:$0xff] %v211
        %245 = vst [vmem:[%s241 + $0x18] sm:$0xff] %v212
        %246 = vst [vmem:[%s241 + $0x20] sm:$0xff] %v213
        %247 = vst [vmem:[%s241 + $0x28] sm:$0xff] %v214
        %248 = vst [vmem:[%s241 + $0x30] sm:$0xff] %v215
        %249 = vst [vmem:[%s241 + $0x38] sm:$0xff] %v216
        %250 = vst [vmem:[%s241 + $0x40] sm:$0xff] %v217
        %251 = vst [vmem:[%s241 + $0x48] sm:$0xff] %v218
        %252 = vst [vmem:[%s241 + $0x50] sm:$0xff] %v219
        %253 = vst [vmem:[%s241 + $0x58] sm:$0xff] %v220
        %254 = vst [vmem:[%s241 + $0x60] sm:$0xff] %v221
        %255 = vst [vmem:[%s241 + $0x68] sm:$0xff] %v222
        %256 = vst [vmem:[%s241 + $0x70] sm:$0xff] %v223
        %257 = vst [vmem:[%s241 + $0x78] sm:$0xff] %v224
        %258 = vst [vmem:[%s241 + $0x80] sm:$0xff] %v225
        %259 = vst [vmem:[%s241 + $0x88] sm:$0xff] %v226
        %260 = vst [vmem:[%s241 + $0x90] sm:$0xff] %v227
        %261 = vst [vmem:[%s241 + $0x98] sm:$0xff] %v228
        %262 = vst [vmem:[%s241 + $0xa0] sm:$0xff] %v229
        %263 = vst [vmem:[%s241 + $0xa8] sm:$0xff] %v230
        %264 = vst [vmem:[%s241 + $0xb0] sm:$0xff] %v231
        %265 = vst [vmem:[%s241 + $0xb8] sm:$0xff] %v232
        %266 = vst [vmem:[%s241 + $0xc0] sm:$0xff] %v233
        %267 = vst [vmem:[%s241 + $0xc8] sm:$0xff] %v234
        %268 = vst [vmem:[%s241 + $0xd0] sm:$0xff] %v235
        %269 = vst [vmem:[%s241 + $0xd8] sm:$0xff] %v236
        %270 = vst [vmem:[%s241 + $0xe0] sm:$0xff] %v237
        %271 = vst [vmem:[%s241 + $0xe8] sm:$0xff] %v238
        %272 = vst [vmem:[%s241 + $0xf0] sm:$0xff] %v239
        %273 = vst [vmem:[%s241 + $0xf8] sm:$0xff] %v240
        %v274 = vld [vmem:[#allocation6] sm:$0xff]
        %v275 = vld [vmem:[#allocation6 + $0x8] sm:$0x1]
        %v276 = vld [vmem:[#allocation2] sm:$0xff]
        %v277 = vld [vmem:[#allocation2 + $0x8] sm:$0xff]
        %v278 = vld [vmem:[#allocation2 + $0x10] sm:$0xff]
        %v279 = vld [vmem:[#allocation2 + $0x18] sm:$0xff]
        %v280 = vld [vmem:[#allocation2 + $0x20] sm:$0xff]
        %v281 = vld [vmem:[#allocation2 + $0x28] sm:$0xff]
        %v282 = vld [vmem:[#allocation2 + $0x30] sm:$0xff]
        %v283 = vld [vmem:[#allocation2 + $0x38] sm:$0xff]
        %v284 = vld [vmem:[#allocation2 + $0x40] sm:$0xff]
        %v285 = vld [vmem:[#allocation2 + $0x48] sm:$0xff]
        %v286 = vld [vmem:[#allocation2 + $0x50] sm:$0xff]
        %v287 = vld [vmem:[#allocation2 + $0x58] sm:$0xff]
        %v288 = vld [vmem:[#allocation2 + $0x60] sm:$0xff]
        %v289 = vld [vmem:[#allocation2 + $0x68] sm:$0xff]
        %v290 = vld [vmem:[#allocation2 + $0x70] sm:$0xff]
        %v291 = vld [vmem:[#allocation2 + $0x78] sm:$0xff]
        %v292 = vld [vmem:[#allocation2 + $0x80] sm:$0xff]
        %v293 = vld [vmem:[#allocation2 + $0x88] sm:$0xff]
        %v294 = vld [vmem:[#allocation2 + $0x90] sm:$0xff]
        %v295 = vld [vmem:[#allocation2 + $0x98] sm:$0xff]
        %v296 = vld [vmem:[#allocation2 + $0xa0] sm:$0xff]
        %v297 = vld [vmem:[#allocation2 + $0xa8] sm:$0xff]
        %v298 = vld [vmem:[#allocation2 + $0xb0] sm:$0xff]
        %v299 = vld [vmem:[#allocation2 + $0xb8] sm:$0xff]
        %v300 = vld [vmem:[#allocation2 + $0xc0] sm:$0xff]
        %v301 = vld [vmem:[#allocation2 + $0xc8] sm:$0xff]
        %v302 = vld [vmem:[#allocation2 + $0xd0] sm:$0xff]
        %v303 = vld [vmem:[#allocation2 + $0xd8] sm:$0xff]
        %v304 = vld [vmem:[#allocation2 + $0xe0] sm:$0xff]
        %v305 = vld [vmem:[#allocation2 + $0xe8] sm:$0xff]
        %v306 = vld [vmem:[#allocation2 + $0xf0] sm:$0xff]
        %v307 = vld [vmem:[#allocation2 + $0xf8] sm:$0xff]
        %vm340 = vcmask 1040384
        %v341 = vrot.slane %v276, 7
        %v342 = vrot.slane %v277, 7
        %v343 = vsel %vm340, %v341, %v342
        %v344 = vrot.slane %v278, 7
        %v345 = vrot.slane %v279, 7
        %v346 = vsel %vm340, %v344, %v345
        %v347 = vrot.slane %v280, 7
        %v348 = vrot.slane %v281, 7
        %v349 = vsel %vm340, %v347, %v348
        %v350 = vrot.slane %v282, 7
        %v351 = vrot.slane %v283, 7
        %v352 = vsel %vm340, %v350, %v351
        %v353 = vrot.slane %v284, 7
        %v354 = vrot.slane %v285, 7
        %v355 = vsel %vm340, %v353, %v354
        %v356 = vrot.slane %v286, 7
        %v357 = vrot.slane %v287, 7
        %v358 = vsel %vm340, %v356, %v357
        %v359 = vrot.slane %v288, 7
        %v360 = vrot.slane %v289, 7
        %v361 = vsel %vm340, %v359, %v360
        %v362 = vrot.slane %v290, 7
        %v363 = vrot.slane %v291, 7
        %v364 = vsel %vm340, %v362, %v363
        %v365 = vrot.slane %v292, 7
        %v366 = vrot.slane %v293, 7
        %v367 = vsel %vm340, %v365, %v366
        %v368 = vrot.slane %v294, 7
        %v369 = vrot.slane %v295, 7
        %v370 = vsel %vm340, %v368, %v369
        %v371 = vrot.slane %v296, 7
        %v372 = vrot.slane %v297, 7
        %v373 = vsel %vm340, %v371, %v372
        %v374 = vrot.slane %v298, 7
        %v375 = vrot.slane %v299, 7
        %v376 = vsel %vm340, %v374, %v375
        %v377 = vrot.slane %v300, 7
        %v378 = vrot.slane %v301, 7
        %v379 = vsel %vm340, %v377, %v378
        %v380 = vrot.slane %v302, 7
        %v381 = vrot.slane %v303, 7
        %v382 = vsel %vm340, %v380, %v381
        %v383 = vrot.slane %v304, 7
        %v384 = vrot.slane %v305, 7
        %v385 = vsel %vm340, %v383, %v384
        %v386 = vrot.slane %v306, 7
        %v387 = vrot.slane %v307, 7
        %v388 = vsel %vm340, %v386, %v387
        %v421 = vsel %vm340, 0.0, %v341
        %v422 = vsel %vm340, 0.0, %v344
        %v423 = vsel %vm340, 0.0, %v347
        %v424 = vsel %vm340, 0.0, %v350
        %v425 = vsel %vm340, 0.0, %v353
        %v426 = vsel %vm340, 0.0, %v356
        %v427 = vsel %vm340, 0.0, %v359
        %v428 = vsel %vm340, 0.0, %v362
        %v429 = vsel %vm340, 0.0, %v365
        %v430 = vsel %vm340, 0.0, %v368
        %v431 = vsel %vm340, 0.0, %v371
        %v432 = vsel %vm340, 0.0, %v374
        %v433 = vsel %vm340, 0.0, %v377
        %v434 = vsel %vm340, 0.0, %v380
        %v435 = vsel %vm340, 0.0, %v383
        %v436 = vsel %vm340, 0.0, %v386
        %vm437 = vcmask 1046528
        %v438 = vrot.slane %v276, 1
        %v439 = vrot.slane %v277, 1
        %v440 = vsel %vm437, %v438, %v439
        %v441 = vrot.slane %v278, 1
        %v442 = vrot.slane %v279, 1
        %v443 = vsel %vm437, %v441, %v442
        %v444 = vrot.slane %v280, 1
        %v445 = vrot.slane %v281, 1
        %v446 = vsel %vm437, %v444, %v445
        %v447 = vrot.slane %v282, 1
        %v448 = vrot.slane %v283, 1
        %v449 = vsel %vm437, %v447, %v448
        %v450 = vrot.slane %v284, 1
        %v451 = vrot.slane %v285, 1
        %v452 = vsel %vm437, %v450, %v451
        %v453 = vrot.slane %v286, 1
        %v454 = vrot.slane %v287, 1
        %v455 = vsel %vm437, %v453, %v454
        %v456 = vrot.slane %v288, 1
        %v457 = vrot.slane %v289, 1
        %v458 = vsel %vm437, %v456, %v457
        %v459 = vrot.slane %v290, 1
        %v460 = vrot.slane %v291, 1
        %v461 = vsel %vm437, %v459, %v460
        %v462 = vrot.slane %v292, 1
        %v463 = vrot.slane %v293, 1
        %v464 = vsel %vm437, %v462, %v463
        %v465 = vrot.slane %v294, 1
        %v466 = vrot.slane %v295, 1
        %v467 = vsel %vm437, %v465, %v466
        %v468 = vrot.slane %v296, 1
        %v469 = vrot.slane %v297, 1
        %v470 = vsel %vm437, %v468, %v469
        %v471 = vrot.slane %v298, 1
        %v472 = vrot.slane %v299, 1
        %v473 = vsel %vm437, %v471, %v472
        %v474 = vrot.slane %v300, 1
        %v475 = vrot.slane %v301, 1
        %v476 = vsel %vm437, %v474, %v475
        %v477 = vrot.slane %v302, 1
        %v478 = vrot.slane %v303, 1
        %v479 = vsel %vm437, %v477, %v478
        %v480 = vrot.slane %v304, 1
        %v481 = vrot.slane %v305, 1
        %v482 = vsel %vm437, %v480, %v481
        %v483 = vrot.slane %v306, 1
        %v484 = vrot.slane %v307, 1
        %v485 = vsel %vm437, %v483, %v484
        %v518 = vsel %vm437, %v439, 0.0
        %v519 = vsel %vm437, %v442, 0.0
        %v520 = vsel %vm437, %v445, 0.0
        %v521 = vsel %vm437, %v448, 0.0
        %v522 = vsel %vm437, %v451, 0.0
        %v523 = vsel %vm437, %v454, 0.0
        %v524 = vsel %vm437, %v457, 0.0
        %v525 = vsel %vm437, %v460, 0.0
        %v526 = vsel %vm437, %v463, 0.0
        %v527 = vsel %vm437, %v466, 0.0
        %v528 = vsel %vm437, %v469, 0.0
        %v529 = vsel %vm437, %v472, 0.0
        %v530 = vsel %vm437, %v475, 0.0
        %v531 = vsel %vm437, %v478, 0.0
        %v532 = vsel %vm437, %v481, 0.0
        %v533 = vsel %vm437, %v484, 0.0
        %v534 = vlaneseq
        %v535 = vshrl.u32 %v534, 7
        %v536 = vsub.s32 0, %v535
        %v537 = vrot.slane %v274, %v536
        %v538 = vmul.f32 %v421, %v537
        %v539 = vmul.f32 %v343, %v537
        %v540 = vmul.f32 %v422, %v537
        %v541 = vmul.f32 %v346, %v537
        %v542 = vmul.f32 %v423, %v537
        %v543 = vmul.f32 %v349, %v537
        %v544 = vmul.f32 %v424, %v537
        %v545 = vmul.f32 %v352, %v537
        %v546 = vmul.f32 %v425, %v537
        %v547 = vmul.f32 %v355, %v537
        %v548 = vmul.f32 %v426, %v537
        %v549 = vmul.f32 %v358, %v537
        %v550 = vmul.f32 %v427, %v537
        %v551 = vmul.f32 %v361, %v537
        %v552 = vmul.f32 %v428, %v537
        %v553 = vmul.f32 %v364, %v537
        %v554 = vmul.f32 %v429, %v537
        %v555 = vmul.f32 %v367, %v537
        %v556 = vmul.f32 %v430, %v537
        %v557 = vmul.f32 %v370, %v537
        %v558 = vmul.f32 %v431, %v537
        %v559 = vmul.f32 %v373, %v537
        %v560 = vmul.f32 %v432, %v537
        %v561 = vmul.f32 %v376, %v537
        %v562 = vmul.f32 %v433, %v537
        %v563 = vmul.f32 %v379, %v537
        %v564 = vmul.f32 %v434, %v537
        %v565 = vmul.f32 %v382, %v537
        %v566 = vmul.f32 %v435, %v537
        %v567 = vmul.f32 %v385, %v537
        %v568 = vmul.f32 %v436, %v537
        %v569 = vmul.f32 %v388, %v537
        %v570 = vadd.f32 %v538, 0.0
        %v571 = vadd.f32 %v539, 0.0
        %v572 = vadd.f32 %v540, 0.0
        %v573 = vadd.f32 %v541, 0.0
        %v574 = vadd.f32 %v542, 0.0
        %v575 = vadd.f32 %v543, 0.0
        %v576 = vadd.f32 %v544, 0.0
        %v577 = vadd.f32 %v545, 0.0
        %v578 = vadd.f32 %v546, 0.0
        %v579 = vadd.f32 %v547, 0.0
        %v580 = vadd.f32 %v548, 0.0
        %v581 = vadd.f32 %v549, 0.0
        %v582 = vadd.f32 %v550, 0.0
        %v583 = vadd.f32 %v551, 0.0
        %v584 = vadd.f32 %v552, 0.0
        %v585 = vadd.f32 %v553, 0.0
        %v586 = vadd.f32 %v554, 0.0
        %v587 = vadd.f32 %v555, 0.0
        %v588 = vadd.f32 %v556, 0.0
        %v589 = vadd.f32 %v557, 0.0
        %v590 = vadd.f32 %v558, 0.0
        %v591 = vadd.f32 %v559, 0.0
        %v592 = vadd.f32 %v560, 0.0
        %v593 = vadd.f32 %v561, 0.0
        %v594 = vadd.f32 %v562, 0.0
        %v595 = vadd.f32 %v563, 0.0
        %v596 = vadd.f32 %v564, 0.0
        %v597 = vadd.f32 %v565, 0.0
        %v598 = vadd.f32 %v566, 0.0
        %v599 = vadd.f32 %v567, 0.0
        %v600 = vadd.f32 %v568, 0.0
        %v601 = vadd.f32 %v569, 0.0
        %v602 = vlaneseq
        %v603 = vshrl.u32 %v602, 7
        %v604 = vsub.s32 1, %v603
        %v605 = vrot.slane %v274, %v604
        %v606 = vmul.f32 %v276, %v605
        %v607 = vmul.f32 %v277, %v605
        %v608 = vmul.f32 %v278, %v605
        %v609 = vmul.f32 %v279, %v605
        %v610 = vmul.f32 %v280, %v605
        %v611 = vmul.f32 %v281, %v605
        %v612 = vmul.f32 %v282, %v605
        %v613 = vmul.f32 %v283, %v605
        %v614 = vmul.f32 %v284, %v605
        %v615 = vmul.f32 %v285, %v605
        %v616 = vmul.f32 %v286, %v605
        %v617 = vmul.f32 %v287, %v605
        %v618 = vmul.f32 %v288, %v605
        %v619 = vmul.f32 %v289, %v605
        %v620 = vmul.f32 %v290, %v605
        %v621 = vmul.f32 %v291, %v605
        %v622 = vmul.f32 %v292, %v605
        %v623 = vmul.f32 %v293, %v605
        %v624 = vmul.f32 %v294, %v605
        %v625 = vmul.f32 %v295, %v605
        %v626 = vmul.f32 %v296, %v605
        %v627 = vmul.f32 %v297, %v605
        %v628 = vmul.f32 %v298, %v605
        %v629 = vmul.f32 %v299, %v605
        %v630 = vmul.f32 %v300, %v605
        %v631 = vmul.f32 %v301, %v605
        %v632 = vmul.f32 %v302, %v605
        %v633 = vmul.f32 %v303, %v605
        %v634 = vmul.f32 %v304, %v605
        %v635 = vmul.f32 %v305, %v605
        %v636 = vmul.f32 %v306, %v605
        %v637 = vmul.f32 %v307, %v605
        %v638 = vadd.f32 %v570, %v606
        %v639 = vadd.f32 %v571, %v607
        %v640 = vadd.f32 %v572, %v608
        %v641 = vadd.f32 %v573, %v609
        %v642 = vadd.f32 %v574, %v610
        %v643 = vadd.f32 %v575, %v611
        %v644 = vadd.f32 %v576, %v612
        %v645 = vadd.f32 %v577, %v613
        %v646 = vadd.f32 %v578, %v614
        %v647 = vadd.f32 %v579, %v615
        %v648 = vadd.f32 %v580, %v616
        %v649 = vadd.f32 %v581, %v617
        %v650 = vadd.f32 %v582, %v618
        %v651 = vadd.f32 %v583, %v619
        %v652 = vadd.f32 %v584, %v620
        %v653 = vadd.f32 %v585, %v621
        %v654 = vadd.f32 %v586, %v622
        %v655 = vadd.f32 %v587, %v623
        %v656 = vadd.f32 %v588, %v624
        %v657 = vadd.f32 %v589, %v625
        %v658 = vadd.f32 %v590, %v626
        %v659 = vadd.f32 %v591, %v627
        %v660 = vadd.f32 %v592, %v628
        %v661 = vadd.f32 %v593, %v629
        %v662 = vadd.f32 %v594, %v630
        %v663 = vadd.f32 %v595, %v631
        %v664 = vadd.f32 %v596, %v632
        %v665 = vadd.f32 %v597, %v633
        %v666 = vadd.f32 %v598, %v634
        %v667 = vadd.f32 %v599, %v635
        %v668 = vadd.f32 %v600, %v636
        %v669 = vadd.f32 %v601, %v637
        %v670 = vlaneseq
        %v671 = vshrl.u32 %v670, 7
        %v672 = vsub.s32 2, %v671
        %v673 = vrot.slane %v274, %v672
        %v674 = vmul.f32 %v440, %v673
        %v675 = vmul.f32 %v518, %v673
        %v676 = vmul.f32 %v443, %v673
        %v677 = vmul.f32 %v519, %v673
        %v678 = vmul.f32 %v446, %v673
        %v679 = vmul.f32 %v520, %v673
        %v680 = vmul.f32 %v449, %v673
        %v681 = vmul.f32 %v521, %v673
        %v682 = vmul.f32 %v452, %v673
        %v683 = vmul.f32 %v522, %v673
        %v684 = vmul.f32 %v455, %v673
        %v685 = vmul.f32 %v523, %v673
        %v686 = vmul.f32 %v458, %v673
        %v687 = vmul.f32 %v524, %v673
        %v688 = vmul.f32 %v461, %v673
        %v689 = vmul.f32 %v525, %v673
        %v690 = vmul.f32 %v464, %v673
        %v691 = vmul.f32 %v526, %v673
        %v692 = vmul.f32 %v467, %v673
        %v693 = vmul.f32 %v527, %v673
        %v694 = vmul.f32 %v470, %v673
        %v695 = vmul.f32 %v528, %v673
        %v696 = vmul.f32 %v473, %v673
        %v697 = vmul.f32 %v529, %v673
        %v698 = vmul.f32 %v476, %v673
        %v699 = vmul.f32 %v530, %v673
        %v700 = vmul.f32 %v479, %v673
        %v701 = vmul.f32 %v531, %v673
        %v702 = vmul.f32 %v482, %v673
        %v703 = vmul.f32 %v532, %v673
        %v704 = vmul.f32 %v485, %v673
        %v705 = vmul.f32 %v533, %v673
        %v706 = vadd.f32 %v638, %v674
        %v707 = vadd.f32 %v639, %v675
        %v708 = vadd.f32 %v640, %v676
        %v709 = vadd.f32 %v641, %v677
        %v710 = vadd.f32 %v642, %v678
        %v711 = vadd.f32 %v643, %v679
        %v712 = vadd.f32 %v644, %v680
        %v713 = vadd.f32 %v645, %v681
        %v714 = vadd.f32 %v646, %v682
        %v715 = vadd.f32 %v647, %v683
        %v716 = vadd.f32 %v648, %v684
        %v717 = vadd.f32 %v649, %v685
        %v718 = vadd.f32 %v650, %v686
        %v719 = vadd.f32 %v651, %v687
        %v720 = vadd.f32 %v652, %v688
        %v721 = vadd.f32 %v653, %v689
        %v722 = vadd.f32 %v654, %v690
        %v723 = vadd.f32 %v655, %v691
        %v724 = vadd.f32 %v656, %v692
        %v725 = vadd.f32 %v657, %v693
        %v726 = vadd.f32 %v658, %v694
        %v727 = vadd.f32 %v659, %v695
        %v728 = vadd.f32 %v660, %v696
        %v729 = vadd.f32 %v661, %v697
        %v730 = vadd.f32 %v662, %v698
        %v731 = vadd.f32 %v663, %v699
        %v732 = vadd.f32 %v664, %v700
        %v733 = vadd.f32 %v665, %v701
        %v734 = vadd.f32 %v666, %v702
        %v735 = vadd.f32 %v667, %v703
        %v736 = vadd.f32 %v668, %v704
        %v737 = vadd.f32 %v669, %v705
        %v738 = vld [vmem:[%s241] sm:$0xff]
        %v739 = vld [vmem:[%s241 + $0x8] sm:$0xff]
        %v740 = vld [vmem:[%s241 + $0x10] sm:$0xff]
        %v741 = vld [vmem:[%s241 + $0x18] sm:$0xff]
        %v742 = vld [vmem:[%s241 + $0x20] sm:$0xff]
        %v743 = vld [vmem:[%s241 + $0x28] sm:$0xff]
        %v744 = vld [vmem:[%s241 + $0x30] sm:$0xff]
        %v745 = vld [vmem:[%s241 + $0x38] sm:$0xff]
        %v746 = vld [vmem:[%s241 + $0x40] sm:$0xff]
        %v747 = vld [vmem:[%s241 + $0x48] sm:$0xff]
        %v748 = vld [vmem:[%s241 + $0x50] sm:$0xff]
        %v749 = vld [vmem:[%s241 + $0x58] sm:$0xff]
        %v750 = vld [vmem:[%s241 + $0x60] sm:$0xff]
        %v751 = vld [vmem:[%s241 + $0x68] sm:$0xff]
        %v752 = vld [vmem:[%s241 + $0x70] sm:$0xff]
        %v753 = vld [vmem:[%s241 + $0x78] sm:$0xff]
        %v754 = vld [vmem:[%s241 + $0x80] sm:$0xff]
        %v755 = vld [vmem:[%s241 + $0x88] sm:$0xff]
        %v756 = vld [vmem:[%s241 + $0x90] sm:$0xff]
        %v757 = vld [vmem:[%s241 + $0x98] sm:$0xff]
        %v758 = vld [vmem:[%s241 + $0xa0] sm:$0xff]
        %v759 = vld [vmem:[%s241 + $0xa8] sm:$0xff]
        %v760 = vld [vmem:[%s241 + $0xb0] sm:$0xff]
        %v761 = vld [vmem:[%s241 + $0xb8] sm:$0xff]
        %v762 = vld [vmem:[%s241 + $0xc0] sm:$0xff]
        %v763 = vld [vmem:[%s241 + $0xc8] sm:$0xff]
        %v764 = vld [vmem:[%s241 + $0xd0] sm:$0xff]
        %v765 = vld [vmem:[%s241 + $0xd8] sm:$0xff]
        %v766 = vld [vmem:[%s241 + $0xe0] sm:$0xff]
        %v767 = vld [vmem:[%s241 + $0xe8] sm:$0xff]
        %v768 = vld [vmem:[%s241 + $0xf0] sm:$0xff]
        %v769 = vld [vmem:[%s241 + $0xf8] sm:$0xff]
        %v802 = vrot.slane %v738, 7
        %v803 = vrot.slane %v739, 7
        %v804 = vsel %vm340, %v802, %v803
        %v805 = vrot.slane %v740, 7
        %v806 = vrot.slane %v741, 7
        %v807 = vsel %vm340, %v805, %v806
        %v808 = vrot.slane %v742, 7
        %v809 = vrot.slane %v743, 7
        %v810 = vsel %vm340, %v808, %v809
        %v811 = vrot.slane %v744, 7
        %v812 = vrot.slane %v745, 7
        %v813 = vsel %vm340, %v811, %v812
        %v814 = vrot.slane %v746, 7
        %v815 = vrot.slane %v747, 7
        %v816 = vsel %vm340, %v814, %v815
        %v817 = vrot.slane %v748, 7
        %v818 = vrot.slane %v749, 7
        %v819 = vsel %vm340, %v817, %v818
        %v820 = vrot.slane %v750, 7
        %v821 = vrot.slane %v751, 7
        %v822 = vsel %vm340, %v820, %v821
        %v823 = vrot.slane %v752, 7
        %v824 = vrot.slane %v753, 7
        %v825 = vsel %vm340, %v823, %v824
        %v826 = vrot.slane %v754, 7
        %v827 = vrot.slane %v755, 7
        %v828 = vsel %vm340, %v826, %v827
        %v829 = vrot.slane %v756, 7
        %v830 = vrot.slane %v757, 7
        %v831 = vsel %vm340, %v829, %v830
        %v832 = vrot.slane %v758, 7
        %v833 = vrot.slane %v759, 7
        %v834 = vsel %vm340, %v832, %v833
        %v835 = vrot.slane %v760, 7
        %v836 = vrot.slane %v761, 7
        %v837 = vsel %vm340, %v835, %v836
        %v838 = vrot.slane %v762, 7
        %v839 = vrot.slane %v763, 7
        %v840 = vsel %vm340, %v838, %v839
        %v841 = vrot.slane %v764, 7
        %v842 = vrot.slane %v765, 7
        %v843 = vsel %vm340, %v841, %v842
        %v844 = vrot.slane %v766, 7
        %v845 = vrot.slane %v767, 7
        %v846 = vsel %vm340, %v844, %v845
        %v847 = vrot.slane %v768, 7
        %v848 = vrot.slane %v769, 7
        %v849 = vsel %vm340, %v847, %v848
        %v882 = vsel %vm340, 0.0, %v802
        %v883 = vsel %vm340, 0.0, %v805
        %v884 = vsel %vm340, 0.0, %v808
        %v885 = vsel %vm340, 0.0, %v811
        %v886 = vsel %vm340, 0.0, %v814
        %v887 = vsel %vm340, 0.0, %v817
        %v888 = vsel %vm340, 0.0, %v820
        %v889 = vsel %vm340, 0.0, %v823
        %v890 = vsel %vm340, 0.0, %v826
        %v891 = vsel %vm340, 0.0, %v829
        %v892 = vsel %vm340, 0.0, %v832
        %v893 = vsel %vm340, 0.0, %v835
        %v894 = vsel %vm340, 0.0, %v838
        %v895 = vsel %vm340, 0.0, %v841
        %v896 = vsel %vm340, 0.0, %v844
        %v897 = vsel %vm340, 0.0, %v847
        %v898 = vrot.slane %v738, 1
        %v899 = vrot.slane %v739, 1
        %v900 = vsel %vm437, %v898, %v899
        %v901 = vrot.slane %v740, 1
        %v902 = vrot.slane %v741, 1
        %v903 = vsel %vm437, %v901, %v902
        %v904 = vrot.slane %v742, 1
        %v905 = vrot.slane %v743, 1
        %v906 = vsel %vm437, %v904, %v905
        %v907 = vrot.slane %v744, 1
        %v908 = vrot.slane %v745, 1
        %v909 = vsel %vm437, %v907, %v908
        %v910 = vrot.slane %v746, 1
        %v911 = vrot.slane %v747, 1
        %v912 = vsel %vm437, %v910, %v911
        %v913 = vrot.slane %v748, 1
        %v914 = vrot.slane %v749, 1
        %v915 = vsel %vm437, %v913, %v914
        %v916 = vrot.slane %v750, 1
        %v917 = vrot.slane %v751, 1
        %v918 = vsel %vm437, %v916, %v917
        %v919 = vrot.slane %v752, 1
        %v920 = vrot.slane %v753, 1
        %v921 = vsel %vm437, %v919, %v920
        %v922 = vrot.slane %v754, 1
        %v923 = vrot.slane %v755, 1
        %v924 = vsel %vm437, %v922, %v923
        %v925 = vrot.slane %v756, 1
        %v926 = vrot.slane %v757, 1
        %v927 = vsel %vm437, %v925, %v926
        %v928 = vrot.slane %v758, 1
        %v929 = vrot.slane %v759, 1
        %v930 = vsel %vm437, %v928, %v929
        %v931 = vrot.slane %v760, 1
        %v932 = vrot.slane %v761, 1
        %v933 = vsel %vm437, %v931, %v932
        %v934 = vrot.slane %v762, 1
        %v935 = vrot.slane %v763, 1
        %v936 = vsel %vm437, %v934, %v935
        %v937 = vrot.slane %v764, 1
        %v938 = vrot.slane %v765, 1
        %v939 = vsel %vm437, %v937, %v938
        %v940 = vrot.slane %v766, 1
        %v941 = vrot.slane %v767, 1
        %v942 = vsel %vm437, %v940, %v941
        %v943 = vrot.slane %v768, 1
        %v944 = vrot.slane %v769, 1
        %v945 = vsel %vm437, %v943, %v944
        %v978 = vsel %vm437, %v899, 0.0
        %v979 = vsel %vm437, %v902, 0.0
        %v980 = vsel %vm437, %v905, 0.0
        %v981 = vsel %vm437, %v908, 0.0
        %v982 = vsel %vm437, %v911, 0.0
        %v983 = vsel %vm437, %v914, 0.0
        %v984 = vsel %vm437, %v917, 0.0
        %v985 = vsel %vm437, %v920, 0.0
        %v986 = vsel %vm437, %v923, 0.0
        %v987 = vsel %vm437, %v926, 0.0
        %v988 = vsel %vm437, %v929, 0.0
        %v989 = vsel %vm437, %v932, 0.0
        %v990 = vsel %vm437, %v935, 0.0
        %v991 = vsel %vm437, %v938, 0.0
        %v992 = vsel %vm437, %v941, 0.0
        %v993 = vsel %vm437, %v944, 0.0
        %v994 = vlaneseq
        %v995 = vshrl.u32 %v994, 7
        %v996 = vsub.s32 3, %v995
        %v997 = vrot.slane %v274, %v996
        %v998 = vmul.f32 %v882, %v997
        %v999 = vmul.f32 %v804, %v997
        %v1000 = vmul.f32 %v883, %v997
        %v1001 = vmul.f32 %v807, %v997
        %v1002 = vmul.f32 %v884, %v997
        %v1003 = vmul.f32 %v810, %v997
        %v1004 = vmul.f32 %v885, %v997
        %v1005 = vmul.f32 %v813, %v997
        %v1006 = vmul.f32 %v886, %v997
        %v1007 = vmul.f32 %v816, %v997
        %v1008 = vmul.f32 %v887, %v997
        %v1009 = vmul.f32 %v819, %v997
        %v1010 = vmul.f32 %v888, %v997
        %v1011 = vmul.f32 %v822, %v997
        %v1012 = vmul.f32 %v889, %v997
        %v1013 = vmul.f32 %v825, %v997
        %v1014 = vmul.f32 %v890, %v997
        %v1015 = vmul.f32 %v828, %v997
        %v1016 = vmul.f32 %v891, %v997
        %v1017 = vmul.f32 %v831, %v997
        %v1018 = vmul.f32 %v892, %v997
        %v1019 = vmul.f32 %v834, %v997
        %v1020 = vmul.f32 %v893, %v997
        %v1021 = vmul.f32 %v837, %v997
        %v1022 = vmul.f32 %v894, %v997
        %v1023 = vmul.f32 %v840, %v997
        %v1024 = vmul.f32 %v895, %v997
        %v1025 = vmul.f32 %v843, %v997
        %v1026 = vmul.f32 %v896, %v997
        %v1027 = vmul.f32 %v846, %v997
        %v1028 = vmul.f32 %v897, %v997
        %v1029 = vmul.f32 %v849, %v997
        %v1030 = vadd.f32 %v706, %v998
        %v1031 = vadd.f32 %v707, %v999
        %v1032 = vadd.f32 %v708, %v1000
        %v1033 = vadd.f32 %v709, %v1001
        %v1034 = vadd.f32 %v710, %v1002
        %v1035 = vadd.f32 %v711, %v1003
        %v1036 = vadd.f32 %v712, %v1004
        %v1037 = vadd.f32 %v713, %v1005
        %v1038 = vadd.f32 %v714, %v1006
        %v1039 = vadd.f32 %v715, %v1007
        %v1040 = vadd.f32 %v716, %v1008
        %v1041 = vadd.f32 %v717, %v1009
        %v1042 = vadd.f32 %v718, %v1010
        %v1043 = vadd.f32 %v719, %v1011
        %v1044 = vadd.f32 %v720, %v1012
        %v1045 = vadd.f32 %v721, %v1013
        %v1046 = vadd.f32 %v722, %v1014
        %v1047 = vadd.f32 %v723, %v1015
        %v1048 = vadd.f32 %v724, %v1016
        %v1049 = vadd.f32 %v725, %v1017
        %v1050 = vadd.f32 %v726, %v1018
        %v1051 = vadd.f32 %v727, %v1019
        %v1052 = vadd.f32 %v728, %v1020
        %v1053 = vadd.f32 %v729, %v1021
        %v1054 = vadd.f32 %v730, %v1022
        %v1055 = vadd.f32 %v731, %v1023
        %v1056 = vadd.f32 %v732, %v1024
        %v1057 = vadd.f32 %v733, %v1025
        %v1058 = vadd.f32 %v734, %v1026
        %v1059 = vadd.f32 %v735, %v1027
        %v1060 = vadd.f32 %v736, %v1028
        %v1061 = vadd.f32 %v737, %v1029
        %v1062 = vlaneseq
        %v1063 = vshrl.u32 %v1062, 7
        %v1064 = vsub.s32 4, %v1063
        %v1065 = vrot.slane %v274, %v1064
        %v1066 = vmul.f32 %v738, %v1065
        %v1067 = vmul.f32 %v739, %v1065
        %v1068 = vmul.f32 %v740, %v1065
        %v1069 = vmul.f32 %v741, %v1065
        %v1070 = vmul.f32 %v742, %v1065
        %v1071 = vmul.f32 %v743, %v1065
        %v1072 = vmul.f32 %v744, %v1065
        %v1073 = vmul.f32 %v745, %v1065
        %v1074 = vmul.f32 %v746, %v1065
        %v1075 = vmul.f32 %v747, %v1065
        %v1076 = vmul.f32 %v748, %v1065
        %v1077 = vmul.f32 %v749, %v1065
        %v1078 = vmul.f32 %v750, %v1065
        %v1079 = vmul.f32 %v751, %v1065
        %v1080 = vmul.f32 %v752, %v1065
        %v1081 = vmul.f32 %v753, %v1065
        %v1082 = vmul.f32 %v754, %v1065
        %v1083 = vmul.f32 %v755, %v1065
        %v1084 = vmul.f32 %v756, %v1065
        %v1085 = vmul.f32 %v757, %v1065
        %v1086 = vmul.f32 %v758, %v1065
        %v1087 = vmul.f32 %v759, %v1065
        %v1088 = vmul.f32 %v760, %v1065
        %v1089 = vmul.f32 %v761, %v1065
        %v1090 = vmul.f32 %v762, %v1065
        %v1091 = vmul.f32 %v763, %v1065
        %v1092 = vmul.f32 %v764, %v1065
        %v1093 = vmul.f32 %v765, %v1065
        %v1094 = vmul.f32 %v766, %v1065
        %v1095 = vmul.f32 %v767, %v1065
        %v1096 = vmul.f32 %v768, %v1065
        %v1097 = vmul.f32 %v769, %v1065
        %v1098 = vadd.f32 %v1030, %v1066
        %v1099 = vadd.f32 %v1031, %v1067
        %v1100 = vadd.f32 %v1032, %v1068
        %v1101 = vadd.f32 %v1033, %v1069
        %v1102 = vadd.f32 %v1034, %v1070
        %v1103 = vadd.f32 %v1035, %v1071
        %v1104 = vadd.f32 %v1036, %v1072
        %v1105 = vadd.f32 %v1037, %v1073
        %v1106 = vadd.f32 %v1038, %v1074
        %v1107 = vadd.f32 %v1039, %v1075
        %v1108 = vadd.f32 %v1040, %v1076
        %v1109 = vadd.f32 %v1041, %v1077
        %v1110 = vadd.f32 %v1042, %v1078
        %v1111 = vadd.f32 %v1043, %v1079
        %v1112 = vadd.f32 %v1044, %v1080
        %v1113 = vadd.f32 %v1045, %v1081
        %v1114 = vadd.f32 %v1046, %v1082
        %v1115 = vadd.f32 %v1047, %v1083
        %v1116 = vadd.f32 %v1048, %v1084
        %v1117 = vadd.f32 %v1049, %v1085
        %v1118 = vadd.f32 %v1050, %v1086
        %v1119 = vadd.f32 %v1051, %v1087
        %v1120 = vadd.f32 %v1052, %v1088
        %v1121 = vadd.f32 %v1053, %v1089
        %v1122 = vadd.f32 %v1054, %v1090
        %v1123 = vadd.f32 %v1055, %v1091
        %v1124 = vadd.f32 %v1056, %v1092
        %v1125 = vadd.f32 %v1057, %v1093
        %v1126 = vadd.f32 %v1058, %v1094
        %v1127 = vadd.f32 %v1059, %v1095
        %v1128 = vadd.f32 %v1060, %v1096
        %v1129 = vadd.f32 %v1061, %v1097
        %v1130 = vlaneseq
        %v1131 = vshrl.u32 %v1130, 7
        %v1132 = vsub.s32 5, %v1131
        %v1133 = vrot.slane %v274, %v1132
        %v1134 = vmul.f32 %v900, %v1133
        %v1135 = vmul.f32 %v978, %v1133
        %v1136 = vmul.f32 %v903, %v1133
        %v1137 = vmul.f32 %v979, %v1133
        %v1138 = vmul.f32 %v906, %v1133
        %v1139 = vmul.f32 %v980, %v1133
        %v1140 = vmul.f32 %v909, %v1133
        %v1141 = vmul.f32 %v981, %v1133
        %v1142 = vmul.f32 %v912, %v1133
        %v1143 = vmul.f32 %v982, %v1133
        %v1144 = vmul.f32 %v915, %v1133
        %v1145 = vmul.f32 %v983, %v1133
        %v1146 = vmul.f32 %v918, %v1133
        %v1147 = vmul.f32 %v984, %v1133
        %v1148 = vmul.f32 %v921, %v1133
        %v1149 = vmul.f32 %v985, %v1133
        %v1150 = vmul.f32 %v924, %v1133
        %v1151 = vmul.f32 %v986, %v1133
        %v1152 = vmul.f32 %v927, %v1133
        %v1153 = vmul.f32 %v987, %v1133
        %v1154 = vmul.f32 %v930, %v1133
        %v1155 = vmul.f32 %v988, %v1133
        %v1156 = vmul.f32 %v933, %v1133
        %v1157 = vmul.f32 %v989, %v1133
        %v1158 = vmul.f32 %v936, %v1133
        %v1159 = vmul.f32 %v990, %v1133
        %v1160 = vmul.f32 %v939, %v1133
        %v1161 = vmul.f32 %v991, %v1133
        %v1162 = vmul.f32 %v942, %v1133
        %v1163 = vmul.f32 %v992, %v1133
        %v1164 = vmul.f32 %v945, %v1133
        %v1165 = vmul.f32 %v993, %v1133
        %v1166 = vadd.f32 %v1098, %v1134
        %v1167 = vadd.f32 %v1099, %v1135
        %v1168 = vadd.f32 %v1100, %v1136
        %v1169 = vadd.f32 %v1101, %v1137
        %v1170 = vadd.f32 %v1102, %v1138
        %v1171 = vadd.f32 %v1103, %v1139
        %v1172 = vadd.f32 %v1104, %v1140
        %v1173 = vadd.f32 %v1105, %v1141
        %v1174 = vadd.f32 %v1106, %v1142
        %v1175 = vadd.f32 %v1107, %v1143
        %v1176 = vadd.f32 %v1108, %v1144
        %v1177 = vadd.f32 %v1109, %v1145
        %v1178 = vadd.f32 %v1110, %v1146
        %v1179 = vadd.f32 %v1111, %v1147
        %v1180 = vadd.f32 %v1112, %v1148
        %v1181 = vadd.f32 %v1113, %v1149
        %v1182 = vadd.f32 %v1114, %v1150
        %v1183 = vadd.f32 %v1115, %v1151
        %v1184 = vadd.f32 %v1116, %v1152
        %v1185 = vadd.f32 %v1117, %v1153
        %v1186 = vadd.f32 %v1118, %v1154
        %v1187 = vadd.f32 %v1119, %v1155
        %v1188 = vadd.f32 %v1120, %v1156
        %v1189 = vadd.f32 %v1121, %v1157
        %v1190 = vadd.f32 %v1122, %v1158
        %v1191 = vadd.f32 %v1123, %v1159
        %v1192 = vadd.f32 %v1124, %v1160
        %v1193 = vadd.f32 %v1125, %v1161
        %v1194 = vadd.f32 %v1126, %v1162
        %v1195 = vadd.f32 %v1127, %v1163
        %v1196 = vadd.f32 %v1128, %v1164
        %v1197 = vadd.f32 %v1129, %v1165
        %s1198 = scalar_lea.vmem [#allocation2], 32
        %v1199 = vld [vmem:[%s1198] sm:$0xff]
        %v1200 = vld [vmem:[%s1198 + $0x8] sm:$0xff]
        %v1201 = vld [vmem:[%s1198 + $0x10] sm:$0xff]
        %v1202 = vld [vmem:[%s1198 + $0x18] sm:$0xff]
        %v1203 = vld [vmem:[%s1198 + $0x20] sm:$0xff]
        %v1204 = vld [vmem:[%s1198 + $0x28] sm:$0xff]
        %v1205 = vld [vmem:[%s1198 + $0x30] sm:$0xff]
        %v1206 = vld [vmem:[%s1198 + $0x38] sm:$0xff]
        %v1207 = vld [vmem:[%s1198 + $0x40] sm:$0xff]
        %v1208 = vld [vmem:[%s1198 + $0x48] sm:$0xff]
        %v1209 = vld [vmem:[%s1198 + $0x50] sm:$0xff]
        %v1210 = vld [vmem:[%s1198 + $0x58] sm:$0xff]
        %v1211 = vld [vmem:[%s1198 + $0x60] sm:$0xff]
        %v1212 = vld [vmem:[%s1198 + $0x68] sm:$0xff]
        %v1213 = vld [vmem:[%s1198 + $0x70] sm:$0xff]
        %v1214 = vld [vmem:[%s1198 + $0x78] sm:$0xff]
        %v1215 = vld [vmem:[%s1198 + $0x80] sm:$0xff]
        %v1216 = vld [vmem:[%s1198 + $0x88] sm:$0xff]
        %v1217 = vld [vmem:[%s1198 + $0x90] sm:$0xff]
        %v1218 = vld [vmem:[%s1198 + $0x98] sm:$0xff]
        %v1219 = vld [vmem:[%s1198 + $0xa0] sm:$0xff]
        %v1220 = vld [vmem:[%s1198 + $0xa8] sm:$0xff]
        %v1221 = vld [vmem:[%s1198 + $0xb0] sm:$0xff]
        %v1222 = vld [vmem:[%s1198 + $0xb8] sm:$0xff]
        %v1223 = vld [vmem:[%s1198 + $0xc0] sm:$0xff]
        %v1224 = vld [vmem:[%s1198 + $0xc8] sm:$0xff]
        %v1225 = vld [vmem:[%s1198 + $0xd0] sm:$0xff]
        %v1226 = vld [vmem:[%s1198 + $0xd8] sm:$0xff]
        %v1227 = vld [vmem:[%s1198 + $0xe0] sm:$0xff]
        %v1228 = vld [vmem:[%s1198 + $0xe8] sm:$0xff]
        %v1229 = vld [vmem:[%s1198 + $0xf0] sm:$0xff]
        %v1230 = vld [vmem:[%s1198 + $0xf8] sm:$0xff]
        %v1263 = vrot.slane %v1199, 7
        %v1264 = vrot.slane %v1200, 7
        %v1265 = vsel %vm340, %v1263, %v1264
        %v1266 = vrot.slane %v1201, 7
        %v1267 = vrot.slane %v1202, 7
        %v1268 = vsel %vm340, %v1266, %v1267
        %v1269 = vrot.slane %v1203, 7
        %v1270 = vrot.slane %v1204, 7
        %v1271 = vsel %vm340, %v1269, %v1270
        %v1272 = vrot.slane %v1205, 7
        %v1273 = vrot.slane %v1206, 7
        %v1274 = vsel %vm340, %v1272, %v1273
        %v1275 = vrot.slane %v1207, 7
        %v1276 = vrot.slane %v1208, 7
        %v1277 = vsel %vm340, %v1275, %v1276
        %v1278 = vrot.slane %v1209, 7
        %v1279 = vrot.slane %v1210, 7
        %v1280 = vsel %vm340, %v1278, %v1279
        %v1281 = vrot.slane %v1211, 7
        %v1282 = vrot.slane %v1212, 7
        %v1283 = vsel %vm340, %v1281, %v1282
        %v1284 = vrot.slane %v1213, 7
        %v1285 = vrot.slane %v1214, 7
        %v1286 = vsel %vm340, %v1284, %v1285
        %v1287 = vrot.slane %v1215, 7
        %v1288 = vrot.slane %v1216, 7
        %v1289 = vsel %vm340, %v1287, %v1288
        %v1290 = vrot.slane %v1217, 7
        %v1291 = vrot.slane %v1218, 7
        %v1292 = vsel %vm340, %v1290, %v1291
        %v1293 = vrot.slane %v1219, 7
        %v1294 = vrot.slane %v1220, 7
        %v1295 = vsel %vm340, %v1293, %v1294
        %v1296 = vrot.slane %v1221, 7
        %v1297 = vrot.slane %v1222, 7
        %v1298 = vsel %vm340, %v1296, %v1297
        %v1299 = vrot.slane %v1223, 7
        %v1300 = vrot.slane %v1224, 7
        %v1301 = vsel %vm340, %v1299, %v1300
        %v1302 = vrot.slane %v1225, 7
        %v1303 = vrot.slane %v1226, 7
        %v1304 = vsel %vm340, %v1302, %v1303
        %v1305 = vrot.slane %v1227, 7
        %v1306 = vrot.slane %v1228, 7
        %v1307 = vsel %vm340, %v1305, %v1306
        %v1308 = vrot.slane %v1229, 7
        %v1309 = vrot.slane %v1230, 7
        %v1310 = vsel %vm340, %v1308, %v1309
        %v1343 = vsel %vm340, 0.0, %v1263
        %v1344 = vsel %vm340, 0.0, %v1266
        %v1345 = vsel %vm340, 0.0, %v1269
        %v1346 = vsel %vm340, 0.0, %v1272
        %v1347 = vsel %vm340, 0.0, %v1275
        %v1348 = vsel %vm340, 0.0, %v1278
        %v1349 = vsel %vm340, 0.0, %v1281
        %v1350 = vsel %vm340, 0.0, %v1284
        %v1351 = vsel %vm340, 0.0, %v1287
        %v1352 = vsel %vm340, 0.0, %v1290
        %v1353 = vsel %vm340, 0.0, %v1293
        %v1354 = vsel %vm340, 0.0, %v1296
        %v1355 = vsel %vm340, 0.0, %v1299
        %v1356 = vsel %vm340, 0.0, %v1302
        %v1357 = vsel %vm340, 0.0, %v1305
        %v1358 = vsel %vm340, 0.0, %v1308
        %v1359 = vrot.slane %v1199, 1
        %v1360 = vrot.slane %v1200, 1
        %v1361 = vsel %vm437, %v1359, %v1360
        %v1362 = vrot.slane %v1201, 1
        %v1363 = vrot.slane %v1202, 1
        %v1364 = vsel %vm437, %v1362, %v1363
        %v1365 = vrot.slane %v1203, 1
        %v1366 = vrot.slane %v1204, 1
        %v1367 = vsel %vm437, %v1365, %v1366
        %v1368 = vrot.slane %v1205, 1
        %v1369 = vrot.slane %v1206, 1
        %v1370 = vsel %vm437, %v1368, %v1369
        %v1371 = vrot.slane %v1207, 1
        %v1372 = vrot.slane %v1208, 1
        %v1373 = vsel %vm437, %v1371, %v1372
        %v1374 = vrot.slane %v1209, 1
        %v1375 = vrot.slane %v1210, 1
        %v1376 = vsel %vm437, %v1374, %v1375
        %v1377 = vrot.slane %v1211, 1
        %v1378 = vrot.slane %v1212, 1
        %v1379 = vsel %vm437, %v1377, %v1378
        %v1380 = vrot.slane %v1213, 1
        %v1381 = vrot.slane %v1214, 1
        %v1382 = vsel %vm437, %v1380, %v1381
        %v1383 = vrot.slane %v1215, 1
        %v1384 = vrot.slane %v1216, 1
        %v1385 = vsel %vm437, %v1383, %v1384
        %v1386 = vrot.slane %v1217, 1
        %v1387 = vrot.slane %v1218, 1
        %v1388 = vsel %vm437, %v1386, %v1387
        %v1389 = vrot.slane %v1219, 1
        %v1390 = vrot.slane %v1220, 1
        %v1391 = vsel %vm437, %v1389, %v1390
        %v1392 = vrot.slane %v1221, 1
        %v1393 = vrot.slane %v1222, 1
        %v1394 = vsel %vm437, %v1392, %v1393
        %v1395 = vrot.slane %v1223, 1
        %v1396 = vrot.slane %v1224, 1
        %v1397 = vsel %vm437, %v1395, %v1396
        %v1398 = vrot.slane %v1225, 1
        %v1399 = vrot.slane %v1226, 1
        %v1400 = vsel %vm437, %v1398, %v1399
        %v1401 = vrot.slane %v1227, 1
        %v1402 = vrot.slane %v1228, 1
        %v1403 = vsel %vm437, %v1401, %v1402
        %v1404 = vrot.slane %v1229, 1
        %v1405 = vrot.slane %v1230, 1
        %v1406 = vsel %vm437, %v1404, %v1405
        %v1439 = vsel %vm437, %v1360, 0.0
        %v1440 = vsel %vm437, %v1363, 0.0
        %v1441 = vsel %vm437, %v1366, 0.0
        %v1442 = vsel %vm437, %v1369, 0.0
        %v1443 = vsel %vm437, %v1372, 0.0
        %v1444 = vsel %vm437, %v1375, 0.0
        %v1445 = vsel %vm437, %v1378, 0.0
        %v1446 = vsel %vm437, %v1381, 0.0
        %v1447 = vsel %vm437, %v1384, 0.0
        %v1448 = vsel %vm437, %v1387, 0.0
        %v1449 = vsel %vm437, %v1390, 0.0
        %v1450 = vsel %vm437, %v1393, 0.0
        %v1451 = vsel %vm437, %v1396, 0.0
        %v1452 = vsel %vm437, %v1399, 0.0
        %v1453 = vsel %vm437, %v1402, 0.0
        %v1454 = vsel %vm437, %v1405, 0.0
        %v1455 = vlaneseq
        %v1456 = vshrl.u32 %v1455, 7
        %v1457 = vsub.s32 6, %v1456
        %v1458 = vrot.slane %v274, %v1457
        %v1459 = vmul.f32 %v1343, %v1458
        %v1460 = vmul.f32 %v1265, %v1458
        %v1461 = vmul.f32 %v1344, %v1458
        %v1462 = vmul.f32 %v1268, %v1458
        %v1463 = vmul.f32 %v1345, %v1458
        %v1464 = vmul.f32 %v1271, %v1458
        %v1465 = vmul.f32 %v1346, %v1458
        %v1466 = vmul.f32 %v1274, %v1458
        %v1467 = vmul.f32 %v1347, %v1458
        %v1468 = vmul.f32 %v1277, %v1458
        %v1469 = vmul.f32 %v1348, %v1458
        %v1470 = vmul.f32 %v1280, %v1458
        %v1471 = vmul.f32 %v1349, %v1458
        %v1472 = vmul.f32 %v1283, %v1458
        %v1473 = vmul.f32 %v1350, %v1458
        %v1474 = vmul.f32 %v1286, %v1458
        %v1475 = vmul.f32 %v1351, %v1458
        %v1476 = vmul.f32 %v1289, %v1458
        %v1477 = vmul.f32 %v1352, %v1458
        %v1478 = vmul.f32 %v1292, %v1458
        %v1479 = vmul.f32 %v1353, %v1458
        %v1480 = vmul.f32 %v1295, %v1458
        %v1481 = vmul.f32 %v1354, %v1458
        %v1482 = vmul.f32 %v1298, %v1458
        %v1483 = vmul.f32 %v1355, %v1458
        %v1484 = vmul.f32 %v1301, %v1458
        %v1485 = vmul.f32 %v1356, %v1458
        %v1486 = vmul.f32 %v1304, %v1458
        %v1487 = vmul.f32 %v1357, %v1458
        %v1488 = vmul.f32 %v1307, %v1458
        %v1489 = vmul.f32 %v1358, %v1458
        %v1490 = vmul.f32 %v1310, %v1458
        %v1491 = vadd.f32 %v1166, %v1459
        %v1492 = vadd.f32 %v1167, %v1460
        %v1493 = vadd.f32 %v1168, %v1461
        %v1494 = vadd.f32 %v1169, %v1462
        %v1495 = vadd.f32 %v1170, %v1463
        %v1496 = vadd.f32 %v1171, %v1464
        %v1497 = vadd.f32 %v1172, %v1465
        %v1498 = vadd.f32 %v1173, %v1466
        %v1499 = vadd.f32 %v1174, %v1467
        %v1500 = vadd.f32 %v1175, %v1468
        %v1501 = vadd.f32 %v1176, %v1469
        %v1502 = vadd.f32 %v1177, %v1470
        %v1503 = vadd.f32 %v1178, %v1471
        %v1504 = vadd.f32 %v1179, %v1472
        %v1505 = vadd.f32 %v1180, %v1473
        %v1506 = vadd.f32 %v1181, %v1474
        %v1507 = vadd.f32 %v1182, %v1475
        %v1508 = vadd.f32 %v1183, %v1476
        %v1509 = vadd.f32 %v1184, %v1477
        %v1510 = vadd.f32 %v1185, %v1478
        %v1511 = vadd.f32 %v1186, %v1479
        %v1512 = vadd.f32 %v1187, %v1480
        %v1513 = vadd.f32 %v1188, %v1481
        %v1514 = vadd.f32 %v1189, %v1482
        %v1515 = vadd.f32 %v1190, %v1483
        %v1516 = vadd.f32 %v1191, %v1484
        %v1517 = vadd.f32 %v1192, %v1485
        %v1518 = vadd.f32 %v1193, %v1486
        %v1519 = vadd.f32 %v1194, %v1487
        %v1520 = vadd.f32 %v1195, %v1488
        %v1521 = vadd.f32 %v1196, %v1489
        %v1522 = vadd.f32 %v1197, %v1490
        %v1523 = vlaneseq
        %v1524 = vshrl.u32 %v1523, 7
        %v1525 = vsub.s32 7, %v1524
        %v1526 = vrot.slane %v274, %v1525
        %v1527 = vmul.f32 %v1199, %v1526
        %v1528 = vmul.f32 %v1200, %v1526
        %v1529 = vmul.f32 %v1201, %v1526
        %v1530 = vmul.f32 %v1202, %v1526
        %v1531 = vmul.f32 %v1203, %v1526
        %v1532 = vmul.f32 %v1204, %v1526
        %v1533 = vmul.f32 %v1205, %v1526
        %v1534 = vmul.f32 %v1206, %v1526
        %v1535 = vmul.f32 %v1207, %v1526
        %v1536 = vmul.f32 %v1208, %v1526
        %v1537 = vmul.f32 %v1209, %v1526
        %v1538 = vmul.f32 %v1210, %v1526
        %v1539 = vmul.f32 %v1211, %v1526
        %v1540 = vmul.f32 %v1212, %v1526
        %v1541 = vmul.f32 %v1213, %v1526
        %v1542 = vmul.f32 %v1214, %v1526
        %v1543 = vmul.f32 %v1215, %v1526
        %v1544 = vmul.f32 %v1216, %v1526
        %v1545 = vmul.f32 %v1217, %v1526
        %v1546 = vmul.f32 %v1218, %v1526
        %v1547 = vmul.f32 %v1219, %v1526
        %v1548 = vmul.f32 %v1220, %v1526
        %v1549 = vmul.f32 %v1221, %v1526
        %v1550 = vmul.f32 %v1222, %v1526
        %v1551 = vmul.f32 %v1223, %v1526
        %v1552 = vmul.f32 %v1224, %v1526
        %v1553 = vmul.f32 %v1225, %v1526
        %v1554 = vmul.f32 %v1226, %v1526
        %v1555 = vmul.f32 %v1227, %v1526
        %v1556 = vmul.f32 %v1228, %v1526
        %v1557 = vmul.f32 %v1229, %v1526
        %v1558 = vmul.f32 %v1230, %v1526
        %v1559 = vadd.f32 %v1491, %v1527
        %v1560 = vadd.f32 %v1492, %v1528
        %v1561 = vadd.f32 %v1493, %v1529
        %v1562 = vadd.f32 %v1494, %v1530
        %v1563 = vadd.f32 %v1495, %v1531
        %v1564 = vadd.f32 %v1496, %v1532
        %v1565 = vadd.f32 %v1497, %v1533
        %v1566 = vadd.f32 %v1498, %v1534
        %v1567 = vadd.f32 %v1499, %v1535
        %v1568 = vadd.f32 %v1500, %v1536
        %v1569 = vadd.f32 %v1501, %v1537
        %v1570 = vadd.f32 %v1502, %v1538
        %v1571 = vadd.f32 %v1503, %v1539
        %v1572 = vadd.f32 %v1504, %v1540
        %v1573 = vadd.f32 %v1505, %v1541
        %v1574 = vadd.f32 %v1506, %v1542
        %v1575 = vadd.f32 %v1507, %v1543
        %v1576 = vadd.f32 %v1508, %v1544
        %v1577 = vadd.f32 %v1509, %v1545
        %v1578 = vadd.f32 %v1510, %v1546
        %v1579 = vadd.f32 %v1511, %v1547
        %v1580 = vadd.f32 %v1512, %v1548
        %v1581 = vadd.f32 %v1513, %v1549
        %v1582 = vadd.f32 %v1514, %v1550
        %v1583 = vadd.f32 %v1515, %v1551
        %v1584 = vadd.f32 %v1516, %v1552
        %v1585 = vadd.f32 %v1517, %v1553
        %v1586 = vadd.f32 %v1518, %v1554
        %v1587 = vadd.f32 %v1519, %v1555
        %v1588 = vadd.f32 %v1520, %v1556
        %v1589 = vadd.f32 %v1521, %v1557
        %v1590 = vadd.f32 %v1522, %v1558
        %v1591 = vlaneseq
        %v1592 = vshrl.u32 %v1591, 7
        %v1593 = vsub.s32 0, %v1592
        %v1594 = vrot.slane %v275, %v1593
        %v1595 = vmul.f32 %v1361, %v1594
        %v1596 = vmul.f32 %v1439, %v1594
        %v1597 = vmul.f32 %v1364, %v1594
        %v1598 = vmul.f32 %v1440, %v1594
        %v1599 = vmul.f32 %v1367, %v1594
        %v1600 = vmul.f32 %v1441, %v1594
        %v1601 = vmul.f32 %v1370, %v1594
        %v1602 = vmul.f32 %v1442, %v1594
        %v1603 = vmul.f32 %v1373, %v1594
        %v1604 = vmul.f32 %v1443, %v1594
        %v1605 = vmul.f32 %v1376, %v1594
        %v1606 = vmul.f32 %v1444, %v1594
        %v1607 = vmul.f32 %v1379, %v1594
        %v1608 = vmul.f32 %v1445, %v1594
        %v1609 = vmul.f32 %v1382, %v1594
        %v1610 = vmul.f32 %v1446, %v1594
        %v1611 = vmul.f32 %v1385, %v1594
        %v1612 = vmul.f32 %v1447, %v1594
        %v1613 = vmul.f32 %v1388, %v1594
        %v1614 = vmul.f32 %v1448, %v1594
        %v1615 = vmul.f32 %v1391, %v1594
        %v1616 = vmul.f32 %v1449, %v1594
        %v1617 = vmul.f32 %v1394, %v1594
        %v1618 = vmul.f32 %v1450, %v1594
        %v1619 = vmul.f32 %v1397, %v1594
        %v1620 = vmul.f32 %v1451, %v1594
        %v1621 = vmul.f32 %v1400, %v1594
        %v1622 = vmul.f32 %v1452, %v1594
        %v1623 = vmul.f32 %v1403, %v1594
        %v1624 = vmul.f32 %v1453, %v1594
        %v1625 = vmul.f32 %v1406, %v1594
        %v1626 = vmul.f32 %v1454, %v1594
        %v1627 = vadd.f32 %v1559, %v1595
        %v1628 = vadd.f32 %v1560, %v1596
        %v1629 = vadd.f32 %v1561, %v1597
        %v1630 = vadd.f32 %v1562, %v1598
        %v1631 = vadd.f32 %v1563, %v1599
        %v1632 = vadd.f32 %v1564, %v1600
        %v1633 = vadd.f32 %v1565, %v1601
        %v1634 = vadd.f32 %v1566, %v1602
        %v1635 = vadd.f32 %v1567, %v1603
        %v1636 = vadd.f32 %v1568, %v1604
        %v1637 = vadd.f32 %v1569, %v1605
        %v1638 = vadd.f32 %v1570, %v1606
        %v1639 = vadd.f32 %v1571, %v1607
        %v1640 = vadd.f32 %v1572, %v1608
        %v1641 = vadd.f32 %v1573, %v1609
        %v1642 = vadd.f32 %v1574, %v1610
        %v1643 = vadd.f32 %v1575, %v1611
        %v1644 = vadd.f32 %v1576, %v1612
        %v1645 = vadd.f32 %v1577, %v1613
        %v1646 = vadd.f32 %v1578, %v1614
        %v1647 = vadd.f32 %v1579, %v1615
        %v1648 = vadd.f32 %v1580, %v1616
        %v1649 = vadd.f32 %v1581, %v1617
        %v1650 = vadd.f32 %v1582, %v1618
        %v1651 = vadd.f32 %v1583, %v1619
        %v1652 = vadd.f32 %v1584, %v1620
        %v1653 = vadd.f32 %v1585, %v1621
        %v1654 = vadd.f32 %v1586, %v1622
        %v1655 = vadd.f32 %v1587, %v1623
        %v1656 = vadd.f32 %v1588, %v1624
        %v1657 = vadd.f32 %v1589, %v1625
        %v1658 = vadd.f32 %v1590, %v1626
        %v1659 = vld [vmem:[%s2] sm:$0x1]
        %v1661 = vlaneseq
        %v1662 = vshrl.u32 %v1661, 7
        %v1663 = vsub.s32 0, %v1662
        %v1664 = vrot.slane %v1659, %v1663
        %v1666 = vadd.f32 %v1627, %v1664
        %v1667 = vadd.f32 %v1628, %v1664
        %v1668 = vadd.f32 %v1629, %v1664
        %v1669 = vadd.f32 %v1630, %v1664
        %v1670 = vadd.f32 %v1631, %v1664
        %v1671 = vadd.f32 %v1632, %v1664
        %v1672 = vadd.f32 %v1633, %v1664
        %v1673 = vadd.f32 %v1634, %v1664
        %v1674 = vadd.f32 %v1635, %v1664
        %v1675 = vadd.f32 %v1636, %v1664
        %v1676 = vadd.f32 %v1637, %v1664
        %v1677 = vadd.f32 %v1638, %v1664
        %v1678 = vadd.f32 %v1639, %v1664
        %v1679 = vadd.f32 %v1640, %v1664
        %v1680 = vadd.f32 %v1641, %v1664
        %v1681 = vadd.f32 %v1642, %v1664
        %v1682 = vadd.f32 %v1643, %v1664
        %v1683 = vadd.f32 %v1644, %v1664
        %v1684 = vadd.f32 %v1645, %v1664
        %v1685 = vadd.f32 %v1646, %v1664
        %v1686 = vadd.f32 %v1647, %v1664
        %v1687 = vadd.f32 %v1648, %v1664
        %v1688 = vadd.f32 %v1649, %v1664
        %v1689 = vadd.f32 %v1650, %v1664
        %v1690 = vadd.f32 %v1651, %v1664
        %v1691 = vadd.f32 %v1652, %v1664
        %v1692 = vadd.f32 %v1653, %v1664
        %v1693 = vadd.f32 %v1654, %v1664
        %v1694 = vadd.f32 %v1655, %v1664
        %v1695 = vadd.f32 %v1656, %v1664
        %v1696 = vadd.f32 %v1657, %v1664
        %v1697 = vadd.f32 %v1658, %v1664
        %1698 = vst [vmem:[%s203] sm:$0xff] %v1666
        %1699 = vst [vmem:[%s203 + $0x8] sm:$0xff] %v1667
        %1700 = vst [vmem:[%s203 + $0x10] sm:$0xff] %v1668
        %1701 = vst [vmem:[%s203 + $0x18] sm:$0xff] %v1669
        %1702 = vst [vmem:[%s203 + $0x20] sm:$0xff] %v1670
        %1703 = vst [vmem:[%s203 + $0x28] sm:$0xff] %v1671
        %1704 = vst [vmem:[%s203 + $0x30] sm:$0xff] %v1672
        %1705 = vst [vmem:[%s203 + $0x38] sm:$0xff] %v1673
        %1706 = vst [vmem:[%s203 + $0x40] sm:$0xff] %v1674
        %1707 = vst [vmem:[%s203 + $0x48] sm:$0xff] %v1675
        %1708 = vst [vmem:[%s203 + $0x50] sm:$0xff] %v1676
        %1709 = vst [vmem:[%s203 + $0x58] sm:$0xff] %v1677
        %1710 = vst [vmem:[%s203 + $0x60] sm:$0xff] %v1678
        %1711 = vst [vmem:[%s203 + $0x68] sm:$0xff] %v1679
        %1712 = vst [vmem:[%s203 + $0x70] sm:$0xff] %v1680
        %1713 = vst [vmem:[%s203 + $0x78] sm:$0xff] %v1681
        %1714 = vst [vmem:[%s203 + $0x80] sm:$0xff] %v1682
        %1715 = vst [vmem:[%s203 + $0x88] sm:$0xff] %v1683
        %1716 = vst [vmem:[%s203 + $0x90] sm:$0xff] %v1684
        %1717 = vst [vmem:[%s203 + $0x98] sm:$0xff] %v1685
        %1718 = vst [vmem:[%s203 + $0xa0] sm:$0xff] %v1686
        %1719 = vst [vmem:[%s203 + $0xa8] sm:$0xff] %v1687
        %1720 = vst [vmem:[%s203 + $0xb0] sm:$0xff] %v1688
        %1721 = vst [vmem:[%s203 + $0xb8] sm:$0xff] %v1689
        %1722 = vst [vmem:[%s203 + $0xc0] sm:$0xff] %v1690
        %1723 = vst [vmem:[%s203 + $0xc8] sm:$0xff] %v1691
        %1724 = vst [vmem:[%s203 + $0xd0] sm:$0xff] %v1692
        %1725 = vst [vmem:[%s203 + $0xd8] sm:$0xff] %v1693
        %1726 = vst [vmem:[%s203 + $0xe0] sm:$0xff] %v1694
        %1727 = vst [vmem:[%s203 + $0xe8] sm:$0xff] %v1695
        %1728 = vst [vmem:[%s203 + $0xf0] sm:$0xff] %v1696
        %1729 = vst [vmem:[%s203 + $0xf8] sm:$0xff] %v1697
        %s1730 = sand.u32 %s97, 1
        %s1731 = scalar_lea.sflag [#allocation5], %s1730
        %s1732 = sand.u32 %s97, 1
        %s1733 = smul.addr %s1732, 256
        %s1734 = scalar_lea.vmem [#allocation8], %s1733
        // Predicated region
        $region41: #{tpu_custom_call.1} parent=31 // pred_check
          %p1735 = pneg %p107
        $region42: #{tpu_custom_call.1} parent=31 // pred_check_branch
          %1737 = sbr.rel (%p1735) target = $region44
        $region43: #{tpu_custom_call.1} parent=31 // pred_region
          %s1739 = ssub.s32 4096, 4096
          %1740 = vsyncadd %s1731, %s1739
          %s1741 = smul.addr %s21, 32
          %s1742 = smul.addr %s1741, 128
          %s1743 = scalar_lea.hbm %s3, %s1742
          %s1744 = sshll.u32 %s1734, 4
          %s1745 = int_to_ptr.vmem [resolvable:$true] %s1744
          %1750 = dma.vmem_to_hbm [thread:$0]  %s1745, 4096, %s1743, %s1731, 128, 128, 8
        $region44: #{tpu_custom_call.1} parent=31 // pred_fallthru
          _
      $region32: #{tpu_custom_call.1} parent=5 // pred_fallthru
        _
      %p1751 = scmp.le.s32.totalorder 2, %s16
      // Predicated region
      $region45: #{tpu_custom_call.1} parent=5 // pred_check
        %p1752 = pneg %p1751
      $region46: #{tpu_custom_call.1} parent=5 // pred_check_branch
        %1754 = sbr.rel (%p1752) target = $region48
      $region47: #{tpu_custom_call.1} parent=5 // pred_region
        %s1755 = ssub.s32 %s16, 2
        // Predicated region
        $region49: #{tpu_custom_call.1} parent=47 // pred_check
          %p1756 = pneg %p113
        $region50: #{tpu_custom_call.1} parent=47 // pred_check_branch
          %1758 = sbr.rel (%p1756) target = $region52
        $region51: #{tpu_custom_call.1} parent=47 // pred_region
          %s1759 = sand.u32 %s98, 1
          %s1760 = scalar_lea.sflag [#allocation5], %s1759
          %s1761 = sand.u32 %s98, 1
          %s1762 = smul.addr %s1761, 256
          %s1763 = scalar_lea.vmem [#allocation8], %s1762
          %1764 = dma.done %s1760, 4096
        $region52: #{tpu_custom_call.1} parent=47 // pred_fallthru
          _
      $region48: #{tpu_custom_call.1} parent=5 // pred_fallthru
        _
    $region6: #{tpu_custom_call.1} parent=1 // loop_footer
      %s20 = sadd.s32 1, %s16
    $region7: #{tpu_custom_call.1} parent=1 // loop_footer_branch
      %15 = sbr.rel target = $region3
    $region8: #{tpu_custom_call.1} parent=1 // loop_exit
      _
    %1765 = vsyncpa [#allocation4], 1
    %s1766 = scalar_lea.sflag [#allocation4], 1
    %1767 = vsyncpa %s1766, 1
    %1768 = vsyncpa [#allocation7], 1
    %1769 = vsyncpa [#allocation5], 1
    %s1770 = scalar_lea.sflag [#allocation5], 1
    %1771 = vsyncpa %s1770, 1

</llo_original>
